<compile_context>
chip_gen: v7x
topology: tpu7x:2x2x1
jax: 0.10.0
libtpu: 0.0.40
codegen_flags: <defaults>
</compile_context>

<pallas_src>
import math

import jax
import jax.numpy as jnp
from jax import lax
from jax.experimental import pallas as pl
from jax.experimental.pallas import tpu as pltpu


_SQRT_2_OVER_PI = math.sqrt(2.0 / math.pi)
_GELU_C = 0.044715
_NEG_BIG = -1e30


def _gelu(x):
    # tanh-form GELU: tanh runs on the EUP (its own VLIW slot).
    # TODO(synk): PyTorch F.gelu defaults to the exact erf GELU; the tanh form
    # deviates by <~1e-3 abs.  Swap to lax.erf if exact parity is required.
    return 0.5 * x * (1.0 + jnp.tanh(_SQRT_2_OVER_PI * (x + _GELU_C * x * x * x)))


def _round_up(v, m):
    return (v + m - 1) // m * m


# --------------------------------------------------------------------------
# Pass 1: LN -> linear1 -> GELU -> gate_nn, online segment-softmax pooling
# --------------------------------------------------------------------------
def _pool_kernel(x_ref, bid_ref,
                 ln_g_ref, ln_b_ref,
                 w1_ref, b1_ref,
                 wg1_ref, bg1_ref,
                 wg2_ref, bg2_ref,
                 a_out_ref, glob_ref, max_ref, sum_ref):
    tile = x_ref.shape[0]
    g_pad = glob_ref.shape[1]

    @pl.when(pl.program_id(1) == 0)
    def _init():
        glob_ref[...] = jnp.zeros_like(glob_ref)
        max_ref[...] = jnp.full(max_ref.shape, _NEG_BIG, max_ref.dtype)
        sum_ref[...] = jnp.zeros_like(sum_ref)

    x = x_ref[...].astype(jnp.float32)                       # [T, H]

    # ---- LayerNorm(hidden_channels), eps=1e-5, affine (single-pass stats) --
    mu = jnp.mean(x, axis=-1, keepdims=True)
    var = jnp.mean(x * x, axis=-1, keepdims=True) - mu * mu
    xn = (x - mu) * lax.rsqrt(var + 1e-5)
    xn = xn * ln_g_ref[...] + ln_b_ref[...]

    # ---- linear1 (f32 accum) + GELU in bf16 (+ dropout == identity) --------
    a_lin = jnp.dot(xn.astype(jnp.bfloat16), w1_ref[...],
                    preferred_element_type=jnp.float32) + b1_ref[...]
    a = _gelu(a_lin.astype(jnp.bfloat16))                    # [T, F] bf16
    a_out_ref[...] = a                                       # cache for pass 2

    # ---- gate_nn: Linear(F,F) -> GELU -> Linear(F,1), lane-dense output ----
    g_lin = jnp.dot(a, wg1_ref[...],
                    preferred_element_type=jnp.float32) + bg1_ref[...]
    g = _gelu(g_lin.astype(jnp.bfloat16))                    # [T, F] bf16
    # wg2 is zero-padded to 8 rows (row 0 is the real weight) so the MXU sees
    # M=8; the sublane-sum collapses the zero rows, giving gate as [1, T]
    # directly (no [T,1] -> [1,T] relayout).
    gate8 = lax.dot_general(wg2_ref[...], g, (((1,), (1,)), ((), ())),
                            preferred_element_type=jnp.float32)   # [8, T]
    gate = jnp.sum(gate8, axis=0, keepdims=True) + bg2_ref[...]   # [1, T]

    # ---- graph membership mask in transposed [G, T] layout -----------------
    ids = bid_ref[...]                                       # [1, T] int32
    m_bool = lax.broadcasted_iota(jnp.int32, (g_pad, tile), 0) == ids
    m = m_bool.astype(jnp.float32)                           # [G, T]

    # ---- online (streaming) segment softmax, flash-attention style ---------
    # State kept as [G, 1] columns so rescale broadcasts directly on glob [G,F].
    seg_max = max_ref[0]                                                   # [G,1]
    tile_max = jnp.max(jnp.where(m_bool, gate, _NEG_BIG), axis=1, keepdims=True)
    new_max = jnp.maximum(seg_max, tile_max)                               # [G,1]
    rescale = jnp.exp(seg_max - new_max)                                   # [G,1]
    node_max = jnp.sum(m * new_max, axis=0, keepdims=True)                 # [1,T]
    e = jnp.exp(gate - node_max)                                           # [1,T]
    w = m * e                                                              # [G,T]

    sum_ref[0] = sum_ref[0] * rescale + jnp.sum(w, axis=1, keepdims=True)
    glob_ref[0] = (glob_ref[0] * rescale
                   + jnp.dot(w, a.astype(jnp.float32),
                             preferred_element_type=jnp.float32))
    max_ref[0] = new_max


# --------------------------------------------------------------------------
# Pass 2: gather glob[batch] + linear2(concat(a, glob[batch]))
# --------------------------------------------------------------------------
def _output_kernel(a_ref, bid_ref, glob_ref, w2_ref, b2_ref, out_ref):
    tile = a_ref.shape[0]
    g_pad = glob_ref.shape[0]

    a = a_ref[...]                                           # [T, F] bf16
    ids = bid_ref[...]                                       # [1, T] int32
    m_t = (lax.broadcasted_iota(jnp.int32, (g_pad, tile), 0) == ids
           ).astype(jnp.float32)                             # [G, T]
    # Gather glob[batch] as m_t^T @ glob (K = g_pad, tiny); kept in f32 for
    # accuracy.  TODO(synk): for G in the hundreds+, switch to a take/gather
    # on the VMEM-resident table (or exploit sorted batch ids).
    gathered = lax.dot_general(m_t, glob_ref[...], (((0,), (0,)), ((), ())),
                               preferred_element_type=jnp.float32)   # [T, F]

    # linear2 over the implicit concat([a, glob[batch]]) as one K=2F matmul
    # (fills the 256-deep MXU on v6e/v7x; on v5e a K=128 split is equivalent,
    # and pass 2 is HBM-bound either way).
    feats = jnp.concatenate([a, gathered.astype(jnp.bfloat16)], axis=-1)
    out = jnp.dot(feats, w2_ref[...],
                  preferred_element_type=jnp.float32) + b2_ref[...]
    out_ref[...] = out.astype(out_ref.dtype)


# --------------------------------------------------------------------------
# Wrapper
# --------------------------------------------------------------------------
def global_block(x, batch, num_graphs, params, *,
                 node_tile=1024, num_core_splits=2,
                 x_stream_dtype=jnp.bfloat16, out_dtype=None):
    """GlobalBlock forward: x [N,H] f32, batch [N] int graph ids.

    node_tile: rows per streamed block.  Pick the biggest that fits VMEM:
      ~1-2k rows at H=F=128 on v5e/v6e (16/32 MiB scoped VMEM defaults);
      re-budget on v7x (64 MiB physical / 32 MiB scoped) and set
      vmem_limit_bytes if H/F grow.
    num_core_splits: leading parallel grid axis for pass 1 (use 2 on v7x so
      both TensorCores share the reduction; harmless elsewhere).
    out_dtype: pass-2 (HBM-bound) output dtype; bf16 halves the write stream
      if the consumer tolerates it.  Defaults to x.dtype.
    """
    if node_tile % 128 != 0:
        raise ValueError("node_tile must be a multiple of 128")
    n, h = x.shape
    f = params['w1'].shape[1]
    out_dtype = x.dtype if out_dtype is None else out_dtype
    splits = max(1, int(num_core_splits))

    per_split = -(-n // splits)
    tile = min(node_tile, _round_up(per_split, 128))
    n_pad = _round_up(n, tile * splits)
    n_tiles = n_pad // tile
    tps = n_tiles // splits                        # tiles per split (per core)
    # Reserve one dummy graph row for padded nodes; round G to a sublane mult.
    g_pad = _round_up(num_graphs + 1, 8)

    # Node streams: x in bf16 (largest pass-1 HBM stream), batch ids lane-dense.
    x_p = jnp.pad(x, ((0, n_pad - n), (0, 0))).astype(x_stream_dtype)
    bid = jnp.pad(batch.astype(jnp.int32), (0, n_pad - n),
                  constant_values=num_graphs).reshape(1, n_pad)

    # bf16 MXU operands (f32 accumulation inside the kernels); LN/biases f32.
    ln_g = params['ln_g'].reshape(1, h).astype(jnp.float32)
    ln_b = params['ln_b'].reshape(1, h).astype(jnp.float32)
    w1 = params['w1'].astype(jnp.bfloat16)                        # [H, F]
    b1 = params['b1'].reshape(1, f).astype(jnp.float32)
    wg1 = params['wg1'].astype(jnp.bfloat16)                      # [F, F]
    bg1 = params['bg1'].reshape(1, f).astype(jnp.float32)
    wg2 = jnp.zeros((8, f), jnp.bfloat16).at[0].set(
        params['wg2'].reshape(f).astype(jnp.bfloat16))            # padded to M=8
    bg2 = params['bg2'].reshape(1, 1).astype(jnp.float32)
    w2 = params['w2'].astype(jnp.bfloat16)                        # [2F, H]
    b2 = params['b2'].reshape(1, h).astype(jnp.float32)

    node_in = lambda last: pl.BlockSpec((tile, last), lambda c, i: (c * tps + i, 0))
    const_in = lambda shape: pl.BlockSpec(shape, lambda c, i: (0, 0))

    # ---- pass 1: features + attention pooling ------------------------------
    # Leading axis = per-core split ('parallel', v7x megacore); inner axis is
    # the sequential per-split reduction ('arbitrary').
    a_cache, glob_p, max_p, sum_p = pl.pallas_call(
        _pool_kernel,
        grid=(splits, tps),
        in_specs=[
            node_in(h),                                              # x tile
            pl.BlockSpec((1, tile), lambda c, i: (0, c * tps + i)),  # batch ids
            const_in((1, h)), const_in((1, h)),                      # ln_g, ln_b
            const_in((h, f)), const_in((1, f)),                      # w1, b1
            const_in((f, f)), const_in((1, f)),                      # wg1, bg1
            const_in((8, f)), const_in((1, 1)),                      # wg2, bg2
        ],
        out_specs=(
            node_in(f),                                              # a cache
            pl.BlockSpec((1, g_pad, f), lambda c, i: (c, 0, 0)),     # glob partial
            pl.BlockSpec((1, g_pad, 1), lambda c, i: (c, 0, 0)),     # seg max
            pl.BlockSpec((1, g_pad, 1), lambda c, i: (c, 0, 0)),     # seg sum
        ),
        out_shape=(
            jax.ShapeDtypeStruct((n_pad, f), jnp.bfloat16),
            jax.ShapeDtypeStruct((splits, g_pad, f), jnp.float32),
            jax.ShapeDtypeStruct((splits, g_pad, 1), jnp.float32),
            jax.ShapeDtypeStruct((splits, g_pad, 1), jnp.float32),
        ),
        compiler_params=pltpu.CompilerParams(
            dimension_semantics=("parallel", "arbitrary")),
    )(x_p, bid, ln_g, ln_b, w1, b1, wg1, bg1, wg2, bg2)

    # Tiny flash-style merge of the per-split partials, then the PyG softmax
    # normalization (eps 1e-16).  O(splits * G * F) plain-JAX work.
    gmax = jnp.max(max_p, axis=0, keepdims=True)            # [1, G, 1]
    scale = jnp.exp(max_p - gmax)                            # [S, G, 1]
    seg_sum = jnp.sum(sum_p * scale, axis=0)                 # [G, 1]
    glob = jnp.sum(glob_p * scale, axis=0) / (seg_sum + 1e-16)   # [G, F]

    # ---- pass 2: gather + linear2 (independent tiles, megacore parallel) ---
    out = pl.pallas_call(
        _output_kernel,
        grid=(n_tiles,),
        in_specs=[
            pl.BlockSpec((tile, f), lambda i: (i, 0)),       # cached a tile
            pl.BlockSpec((1, tile), lambda i: (0, i)),       # batch ids
            pl.BlockSpec((g_pad, f), lambda i: (0, 0)),      # glob (resident)
            pl.BlockSpec((2 * f, h), lambda i: (0, 0)),      # w2
            pl.BlockSpec((1, h), lambda i: (0, 0)),          # b2
        ],
        out_specs=pl.BlockSpec((tile, h), lambda i: (i, 0)),
        out_shape=jax.ShapeDtypeStruct((n_pad, h), out_dtype),
        compiler_params=pltpu.CompilerParams(
            dimension_semantics=("parallel",)),
    )(a_cache, bid, glob, w2, b2)

    return out[:n]


# --------------------------------------------------------------------------
# Pure-JAX f32 reference (same tanh GELU) for a sanity check
# --------------------------------------------------------------------------
def global_block_reference(x, batch, num_graphs, p):
    mu = jnp.mean(x, axis=-1, keepdims=True)
    var = jnp.mean((x - mu) ** 2, axis=-1, keepdims=True)
    xn = (x - mu) / jnp.sqrt(var + 1e-5) * p['ln_g'] + p['ln_b']
    a = _gelu(xn @ p['w1'] + p['b1'])
    gate = _gelu(a @ p['wg1'] + p['bg1']) @ p['wg2'] + p['bg2']     # [N, 1]
    m = jax.nn.one_hot(batch, num_graphs, dtype=jnp.float32)        # [N, G]
    node_max = m @ jnp.max(jnp.where(m > 0, gate, -1e30), axis=0, keepdims=True).T
    e = jnp.exp(gate - node_max)
    node_sum = m @ (m.T @ e)
    alpha = e / (node_sum + 1e-16)                                  # PyG softmax eps
    glob = m.T @ (alpha * a)                                        # [G, F]
    return jnp.concatenate([a, glob[batch]], axis=-1) @ p['w2'] + p['b2']


if __name__ == "__main__":
    # Small but lane-dense demo shapes: 512 nodes, hidden=128, filters=128,
    # 4 graphs -> pass 1 runs a (2, 1) split/reduce grid, pass 2 a 2-step
    # parallel grid.  Output kept in f32 here for the correctness check
    # (out_dtype=bf16 is available for HBM-bound consumers).
    N, H, F, G = 512, 128, 128, 4
    key = jax.random.PRNGKey(0)
    ks = jax.random.split(key, 9)

    x = jax.random.normal(ks[0], (N, H), jnp.float32)
    batch = jnp.repeat(jnp.arange(G, dtype=jnp.int32), N // G)      # [N] graph ids

    def init(k, shape, scale):
        return (scale * jax.random.normal(k, shape)).astype(jnp.float32)

    params = dict(
        ln_g=jnp.ones((1, H), jnp.float32),
        ln_b=jnp.zeros((1, H), jnp.float32),
        w1=init(ks[1], (H, F), 1.0 / math.sqrt(H)),
        b1=init(ks[2], (1, F), 0.02),
        wg1=init(ks[3], (F, F), 1.0 / math.sqrt(F)),
        bg1=init(ks[4], (1, F), 0.02),
        wg2=init(ks[5], (F, 1), 1.0 / math.sqrt(F)),
        bg2=init(ks[6], (1, 1), 0.02),
        w2=init(ks[7], (2 * F, H), 1.0 / math.sqrt(2 * F)),
        b2=init(ks[8], (1, H), 0.02),
    )

    out = global_block(x, batch, G, params)
    out = jax.block_until_ready(out)
    assert out.shape == (N, H) and out.dtype == jnp.float32

    ref = global_block_reference(x, batch, G, params)
    max_diff = float(jnp.max(jnp.abs(out - ref)))
    # Tolerance reflects the intentional bf16 streaming / bf16 GELU compute
    # choices (f32 accumulation everywhere); see review correctness notes.
    assert jnp.allclose(out, ref, atol=2e-2, rtol=2e-2), \
        f"max abs diff {max_diff}"

    print("KERNEL_OK")
</pallas_src>

<mosaic_0001>
module attributes {stable_mosaic.version = 11 : i64} {
  func.func @_pool_kernel(%arg0: i32, %arg1: i32, %arg2: memref<256x128xbf16, #tpu.memory_space<vmem>>, %arg3: memref<1x256xi32, #tpu.memory_space<vmem>>, %arg4: memref<1x128xf32, #tpu.memory_space<vmem>>, %arg5: memref<1x128xf32, #tpu.memory_space<vmem>>, %arg6: memref<128x128xbf16, #tpu.memory_space<vmem>>, %arg7: memref<1x128xf32, #tpu.memory_space<vmem>>, %arg8: memref<128x128xbf16, #tpu.memory_space<vmem>>, %arg9: memref<1x128xf32, #tpu.memory_space<vmem>>, %arg10: memref<8x128xbf16, #tpu.memory_space<vmem>>, %arg11: memref<1x1xf32, #tpu.memory_space<vmem>>, %arg12: memref<256x128xbf16, #tpu.memory_space<vmem>>, %arg13: memref<1x8x128xf32, #tpu.memory_space<vmem>>, %arg14: memref<1x8x1xf32, #tpu.memory_space<vmem>>, %arg15: memref<1x8x1xf32, #tpu.memory_space<vmem>>) attributes {dimension_semantics = [#tpu.dimension_semantics<parallel>, #tpu.dimension_semantics<arbitrary>], iteration_bounds = array<i64: 2, 1>, scalar_prefetch = 0 : i64, scratch_operands = 0 : i64, tpu.core_type = #tpu.core_type<tc>, window_params = [{transform_indices = @transform_0, window_bounds = array<i64: 256, 128>}, {transform_indices = @transform_1, window_bounds = array<i64: 1, 256>}, {pipeline_mode = #tpu.pipeline_mode<synchronous>, transform_indices = @transform_2, window_bounds = array<i64: 1, 128>}, {pipeline_mode = #tpu.pipeline_mode<synchronous>, transform_indices = @transform_3, window_bounds = array<i64: 1, 128>}, {pipeline_mode = #tpu.pipeline_mode<synchronous>, transform_indices = @transform_4, window_bounds = array<i64: 128, 128>}, {pipeline_mode = #tpu.pipeline_mode<synchronous>, transform_indices = @transform_5, window_bounds = array<i64: 1, 128>}, {pipeline_mode = #tpu.pipeline_mode<synchronous>, transform_indices = @transform_6, window_bounds = array<i64: 128, 128>}, {pipeline_mode = #tpu.pipeline_mode<synchronous>, transform_indices = @transform_7, window_bounds = array<i64: 1, 128>}, {pipeline_mode = #tpu.pipeline_mode<synchronous>, transform_indices = @transform_8, window_bounds = array<i64: 8, 128>}, {pipeline_mode = #tpu.pipeline_mode<synchronous>, transform_indices = @transform_9, window_bounds = array<i64: 1, 1>}, {transform_indices = @transform_10, window_bounds = array<i64: 256, 128>}, {transform_indices = @transform_11, window_bounds = array<i64: 1, 8, 128>}, {transform_indices = @transform_12, window_bounds = array<i64: 1, 8, 1>}, {transform_indices = @transform_13, window_bounds = array<i64: 1, 8, 1>}]} {
    %c0_i32 = arith.constant 0 : i32
    %0 = arith.cmpi eq, %arg1, %c0_i32 : i32
    %1 = arith.extui %0 : i1 to i32
    %c0_i32_0 = arith.constant 0 : i32
    %2 = arith.cmpi ne, %1, %c0_i32_0 : i32
    scf.if %2 {
      %cst_61 = arith.constant 0.000000e+00 : f32
      %123 = vector.broadcast %cst_61 : f32 to vector<1x8x128xf32>
      %c0_62 = arith.constant 0 : index
      %c0_63 = arith.constant 0 : index
      %c0_64 = arith.constant 0 : index
      %124 = vector.load %arg13[%c0_62, %c0_63, %c0_64] : memref<1x8x128xf32, #tpu.memory_space<vmem>>, vector<1x8x128xf32>
      tpu.vector_store %arg13[%c0_62, %c0_63, %c0_64], %123 {strides = array<i32>} : memref<1x8x128xf32, #tpu.memory_space<vmem>>, vector<1x8x128xf32>,
      %cst_65 = arith.constant -1.000000e+30 : f32
      %125 = vector.broadcast %cst_65 : f32 to vector<1x8x1xf32>
      %c0_66 = arith.constant 0 : index
      %c0_67 = arith.constant 0 : index
      %c0_68 = arith.constant 0 : index
      %126 = vector.load %arg14[%c0_66, %c0_67, %c0_68] : memref<1x8x1xf32, #tpu.memory_space<vmem>>, vector<1x8x1xf32>
      tpu.vector_store %arg14[%c0_66, %c0_67, %c0_68], %125 {strides = array<i32>} : memref<1x8x1xf32, #tpu.memory_space<vmem>>, vector<1x8x1xf32>,
      %cst_69 = arith.constant 0.000000e+00 : f32
      %127 = vector.broadcast %cst_69 : f32 to vector<1x8x1xf32>
      %c0_70 = arith.constant 0 : index
      %c0_71 = arith.constant 0 : index
      %c0_72 = arith.constant 0 : index
      %128 = vector.load %arg15[%c0_70, %c0_71, %c0_72] : memref<1x8x1xf32, #tpu.memory_space<vmem>>, vector<1x8x1xf32>
      tpu.vector_store %arg15[%c0_70, %c0_71, %c0_72], %127 {strides = array<i32>} : memref<1x8x1xf32, #tpu.memory_space<vmem>>, vector<1x8x1xf32>,
    } else {
    }
    %c0 = arith.constant 0 : index
    %c0_1 = arith.constant 0 : index
    %3 = vector.load %arg2[%c0, %c0_1] : memref<256x128xbf16, #tpu.memory_space<vmem>>, vector<256x128xbf16>
    %4 = arith.extf %3 : vector<256x128xbf16> to vector<256x128xf32>
    %cst = arith.constant dense<0.000000e+00> : vector<256xf32>
    %5 = vector.multi_reduction <add>, %4, %cst [1] : vector<256x128xf32> to vector<256xf32>
    %6 = vector.shape_cast %5 : vector<256xf32> to vector<256x1xf32>
    %cst_2 = arith.constant 1.280000e+02 : f32
    %7 = vector.broadcast %cst_2 : f32 to vector<256x1xf32>
    %8 = arith.divf %6, %7 : vector<256x1xf32>
    %9 = arith.mulf %4, %4 : vector<256x128xf32>
    %cst_3 = arith.constant dense<0.000000e+00> : vector<256xf32>
    %10 = vector.multi_reduction <add>, %9, %cst_3 [1] : vector<256x128xf32> to vector<256xf32>
    %11 = vector.shape_cast %10 : vector<256xf32> to vector<256x1xf32>
    %cst_4 = arith.constant 1.280000e+02 : f32
    %12 = vector.broadcast %cst_4 : f32 to vector<256x1xf32>
    %13 = arith.divf %11, %12 : vector<256x1xf32>
    %14 = arith.mulf %8, %8 : vector<256x1xf32>
    %15 = arith.subf %13, %14 : vector<256x1xf32>
    %16 = vector.broadcast %8 : vector<256x1xf32> to vector<256x128xf32>
    %17 = arith.subf %4, %16 : vector<256x128xf32>
    %cst_5 = arith.constant 9.99999974E-6 : f32
    %18 = vector.broadcast %cst_5 : f32 to vector<256x1xf32>
    %19 = arith.addf %15, %18 : vector<256x1xf32>
    %20 = math.rsqrt %19 : vector<256x1xf32>
    %21 = vector.broadcast %20 : vector<256x1xf32> to vector<256x128xf32>
    %22 = arith.mulf %17, %21 : vector<256x128xf32>
    %c0_6 = arith.constant 0 : index
    %c0_7 = arith.constant 0 : index
    %23 = vector.load %arg4[%c0_6, %c0_7] : memref<1x128xf32, #tpu.memory_space<vmem>>, vector<1x128xf32>
    %24 = vector.broadcast %23 : vector<1x128xf32> to vector<256x128xf32>
    %25 = arith.mulf %22, %24 : vector<256x128xf32>
    %c0_8 = arith.constant 0 : index
    %c0_9 = arith.constant 0 : index
    %26 = vector.load %arg5[%c0_8, %c0_9] : memref<1x128xf32, #tpu.memory_space<vmem>>, vector<1x128xf32>
    %27 = vector.broadcast %26 : vector<1x128xf32> to vector<256x128xf32>
    %28 = arith.addf %25, %27 : vector<256x128xf32>
    %29 = arith.truncf %28 : vector<256x128xf32> to vector<256x128xbf16>
    %c0_10 = arith.constant 0 : index
    %c0_11 = arith.constant 0 : index
    %30 = vector.load %arg6[%c0_10, %c0_11] : memref<128x128xbf16, #tpu.memory_space<vmem>>, vector<128x128xbf16>
    %cst_12 = arith.constant dense<0.000000e+00> : vector<256x128xf32>
    %31 = tpu.matmul %29, %30, %cst_12 {dimension_numbers = #tpu.dot_dimension_numbers<[1], [0], [0], [1], [0, 0, 1, 1], [], []>} : vector<256x128xbf16>, vector<128x128xbf16>, vector<256x128xf32> -> vector<256x128xf32>
    %c0_13 = arith.constant 0 : index
    %c0_14 = arith.constant 0 : index
    %32 = vector.load %arg7[%c0_13, %c0_14] : memref<1x128xf32, #tpu.memory_space<vmem>>, vector<1x128xf32>
    %33 = vector.broadcast %32 : vector<1x128xf32> to vector<256x128xf32>
    %34 = arith.addf %31, %33 : vector<256x128xf32>
    %35 = arith.truncf %34 : vector<256x128xf32> to vector<256x128xbf16>
    %cst_15 = arith.constant 5.000000e-01 : bf16
    %36 = vector.broadcast %cst_15 : bf16 to vector<256x128xbf16>
    %37 = arith.mulf %36, %35 : vector<256x128xbf16>
    %cst_16 = arith.constant 4.467770e-02 : bf16
    %38 = vector.broadcast %cst_16 : bf16 to vector<256x128xbf16>
    %39 = arith.mulf %38, %35 : vector<256x128xbf16>
    %40 = arith.mulf %39, %35 : vector<256x128xbf16>
    %41 = arith.mulf %40, %35 : vector<256x128xbf16>
    %42 = arith.addf %35, %41 : vector<256x128xbf16>
    %cst_17 = arith.constant 7.968750e-01 : bf16
    %43 = vector.broadcast %cst_17 : bf16 to vector<256x128xbf16>
    %44 = arith.mulf %43, %42 : vector<256x128xbf16>
    %45 = math.tanh %44 : vector<256x128xbf16>
    %cst_18 = arith.constant 1.000000e+00 : bf16
    %46 = vector.broadcast %cst_18 : bf16 to vector<256x128xbf16>
    %47 = arith.addf %46, %45 : vector<256x128xbf16>
    %48 = arith.mulf %37, %47 : vector<256x128xbf16>
    %c0_19 = arith.constant 0 : index
    %c0_20 = arith.constant 0 : index
    %49 = vector.load %arg12[%c0_19, %c0_20] : memref<256x128xbf16, #tpu.memory_space<vmem>>, vector<256x128xbf16>
    tpu.vector_store %arg12[%c0_19, %c0_20], %48 {strides = array<i32>} : memref<256x128xbf16, #tpu.memory_space<vmem>>, vector<256x128xbf16>,
    %c0_21 = arith.constant 0 : index
    %c0_22 = arith.constant 0 : index
    %50 = vector.load %arg8[%c0_21, %c0_22] : memref<128x128xbf16, #tpu.memory_space<vmem>>, vector<128x128xbf16>
    %cst_23 = arith.constant dense<0.000000e+00> : vector<256x128xf32>
    %51 = tpu.matmul %48, %50, %cst_23 {dimension_numbers = #tpu.dot_dimension_numbers<[1], [0], [0], [1], [0, 0, 1, 1], [], []>} : vector<256x128xbf16>, vector<128x128xbf16>, vector<256x128xf32> -> vector<256x128xf32>
    %c0_24 = arith.constant 0 : index
    %c0_25 = arith.constant 0 : index
    %52 = vector.load %arg9[%c0_24, %c0_25] : memref<1x128xf32, #tpu.memory_space<vmem>>, vector<1x128xf32>
    %53 = vector.broadcast %52 : vector<1x128xf32> to vector<256x128xf32>
    %54 = arith.addf %51, %53 : vector<256x128xf32>
    %55 = arith.truncf %54 : vector<256x128xf32> to vector<256x128xbf16>
    %cst_26 = arith.constant 5.000000e-01 : bf16
    %56 = vector.broadcast %cst_26 : bf16 to vector<256x128xbf16>
    %57 = arith.mulf %56, %55 : vector<256x128xbf16>
    %cst_27 = arith.constant 4.467770e-02 : bf16
    %58 = vector.broadcast %cst_27 : bf16 to vector<256x128xbf16>
    %59 = arith.mulf %58, %55 : vector<256x128xbf16>
    %60 = arith.mulf %59, %55 : vector<256x128xbf16>
    %61 = arith.mulf %60, %55 : vector<256x128xbf16>
    %62 = arith.addf %55, %61 : vector<256x128xbf16>
    %cst_28 = arith.constant 7.968750e-01 : bf16
    %63 = vector.broadcast %cst_28 : bf16 to vector<256x128xbf16>
    %64 = arith.mulf %63, %62 : vector<256x128xbf16>
    %65 = math.tanh %64 : vector<256x128xbf16>
    %cst_29 = arith.constant 1.000000e+00 : bf16
    %66 = vector.broadcast %cst_29 : bf16 to vector<256x128xbf16>
    %67 = arith.addf %66, %65 : vector<256x128xbf16>
    %68 = arith.mulf %57, %67 : vector<256x128xbf16>
    %c0_30 = arith.constant 0 : index
    %c0_31 = arith.constant 0 : index
    %69 = vector.load %arg10[%c0_30, %c0_31] : memref<8x128xbf16, #tpu.memory_space<vmem>>, vector<8x128xbf16>
    %cst_32 = arith.constant dense<0.000000e+00> : vector<8x256xf32>
    %70 = tpu.matmul %69, %68, %cst_32 {dimension_numbers = #tpu.dot_dimension_numbers<[1], [1], [0], [0], [0, 0, 1, 0], [], []>} : vector<8x128xbf16>, vector<256x128xbf16>, vector<8x256xf32> -> vector<8x256xf32>
    %cst_33 = arith.constant dense<0.000000e+00> : vector<256xf32>
    %71 = vector.multi_reduction <add>, %70, %cst_33 [0] : vector<8x256xf32> to vector<256xf32>
    %72 = vector.shape_cast %71 : vector<256xf32> to vector<1x256xf32>
    %c0_34 = arith.constant 0 : index
    %c0_35 = arith.constant 0 : index
    %73 = vector.load %arg11[%c0_34, %c0_35] : memref<1x1xf32, #tpu.memory_space<vmem>>, vector<1x1xf32>
    %74 = vector.broadcast %73 : vector<1x1xf32> to vector<1x256xf32>
    %75 = arith.addf %72, %74 : vector<1x256xf32>
    %c0_36 = arith.constant 0 : index
    %c0_37 = arith.constant 0 : index
    %76 = vector.load %arg3[%c0_36, %c0_37] : memref<1x256xi32, #tpu.memory_space<vmem>>, vector<1x256xi32>
    %77 = tpu.iota {dimensions = array<i32: 0>} : vector<8x256xi32>
    %78 = vector.broadcast %76 : vector<1x256xi32> to vector<8x256xi32>
    %79 = arith.cmpi eq, %77, %78 : vector<8x256xi32>
    %80 = arith.extui %79 : vector<8x256xi1> to vector<8x256xi32>
    %81 = arith.sitofp %80 : vector<8x256xi32> to vector<8x256xf32>
    %c0_38 = arith.constant 0 : index
    %c0_39 = arith.constant 0 : index
    %c0_40 = arith.constant 0 : index
    %82 = vector.load %arg14[%c0_38, %c0_39, %c0_40] : memref<1x8x1xf32, #tpu.memory_space<vmem>>, vector<1x8x1xf32>
    %83 = vector.shape_cast %82 : vector<1x8x1xf32> to vector<8x1xf32>
    %cst_41 = arith.constant -1.000000e+30 : f32
    %84 = vector.shape_cast %75 : vector<1x256xf32> to vector<1x256xf32>
    %85 = vector.broadcast %84 : vector<1x256xf32> to vector<8x256xf32>
    %86 = vector.broadcast %cst_41 : f32 to vector<8x256xf32>
    %87 = arith.select %79, %85, %86 : vector<8x256xi1>, vector<8x256xf32>
    %cst_42 = arith.constant dense<0xFF800000> : vector<8xf32>
    %88 = vector.multi_reduction <maximumf>, %87, %cst_42 [1] : vector<8x256xf32> to vector<8xf32>
    %89 = vector.shape_cast %88 : vector<8xf32> to vector<8x1xf32>
    %90 = arith.maximumf %83, %89 : vector<8x1xf32>
    %91 = arith.subf %83, %90 : vector<8x1xf32>
    %92 = math.exp %91 : vector<8x1xf32>
    %93 = vector.broadcast %90 : vector<8x1xf32> to vector<8x256xf32>
    %94 = arith.mulf %81, %93 : vector<8x256xf32>
    %cst_43 = arith.constant dense<0.000000e+00> : vector<256xf32>
    %95 = vector.multi_reduction <add>, %94, %cst_43 [0] : vector<8x256xf32> to vector<256xf32>
    %96 = vector.shape_cast %95 : vector<256xf32> to vector<1x256xf32>
    %97 = arith.subf %75, %96 : vector<1x256xf32>
    %98 = math.exp %97 : vector<1x256xf32>
    %99 = vector.broadcast %98 : vector<1x256xf32> to vector<8x256xf32>
    %100 = arith.mulf %81, %99 : vector<8x256xf32>
    %c0_44 = arith.constant 0 : index
    %c0_45 = arith.constant 0 : index
    %c0_46 = arith.constant 0 : index
    %101 = vector.load %arg15[%c0_44, %c0_45, %c0_46] : memref<1x8x1xf32, #tpu.memory_space<vmem>>, vector<1x8x1xf32>
    %102 = vector.shape_cast %101 : vector<1x8x1xf32> to vector<8x1xf32>
    %103 = arith.mulf %102, %92 : vector<8x1xf32>
    %cst_47 = arith.constant dense<0.000000e+00> : vector<8xf32>
    %104 = vector.multi_reduction <add>, %100, %cst_47 [1] : vector<8x256xf32> to vector<8xf32>
    %105 = vector.shape_cast %104 : vector<8xf32> to vector<8x1xf32>
    %106 = arith.addf %103, %105 : vector<8x1xf32>
    %c0_48 = arith.constant 0 : index
    %c0_49 = arith.constant 0 : index
    %c0_50 = arith.constant 0 : index
    %107 = vector.load %arg15[%c0_48, %c0_49, %c0_50] : memref<1x8x1xf32, #tpu.memory_space<vmem>>, vector<1x8x1xf32>
    %108 = vector.shape_cast %107 : vector<1x8x1xf32> to vector<8x1xf32>
    %109 = vector.shape_cast %106 : vector<8x1xf32> to vector<1x8x1xf32>
    tpu.vector_store %arg15[%c0_48, %c0_49, %c0_50], %109 {strides = array<i32>} : memref<1x8x1xf32, #tpu.memory_space<vmem>>, vector<1x8x1xf32>,
    %c0_51 = arith.constant 0 : index
    %c0_52 = arith.constant 0 : index
    %c0_53 = arith.constant 0 : index
    %110 = vector.load %arg13[%c0_51, %c0_52, %c0_53] : memref<1x8x128xf32, #tpu.memory_space<vmem>>, vector<1x8x128xf32>
    %111 = vector.shape_cast %110 : vector<1x8x128xf32> to vector<8x128xf32>
    %112 = vector.broadcast %92 : vector<8x1xf32> to vector<8x128xf32>
    %113 = arith.mulf %111, %112 : vector<8x128xf32>
    %114 = arith.extf %48 : vector<256x128xbf16> to vector<256x128xf32>
    %cst_54 = arith.constant dense<0.000000e+00> : vector<8x128xf32>
    %115 = tpu.matmul %100, %114, %cst_54 {dimension_numbers = #tpu.dot_dimension_numbers<[1], [0], [0], [1], [0, 0, 1, 1], [], []>} : vector<8x256xf32>, vector<256x128xf32>, vector<8x128xf32> -> vector<8x128xf32>
    %116 = arith.addf %113, %115 : vector<8x128xf32>
    %c0_55 = arith.constant 0 : index
    %c0_56 = arith.constant 0 : index
    %c0_57 = arith.constant 0 : index
    %117 = vector.load %arg13[%c0_55, %c0_56, %c0_57] : memref<1x8x128xf32, #tpu.memory_space<vmem>>, vector<1x8x128xf32>
    %118 = vector.shape_cast %117 : vector<1x8x128xf32> to vector<8x128xf32>
    %119 = vector.shape_cast %116 : vector<8x128xf32> to vector<1x8x128xf32>
    tpu.vector_store %arg13[%c0_55, %c0_56, %c0_57], %119 {strides = array<i32>} : memref<1x8x128xf32, #tpu.memory_space<vmem>>, vector<1x8x128xf32>,
    %c0_58 = arith.constant 0 : index
    %c0_59 = arith.constant 0 : index
    %c0_60 = arith.constant 0 : index
    %120 = vector.load %arg14[%c0_58, %c0_59, %c0_60] : memref<1x8x1xf32, #tpu.memory_space<vmem>>, vector<1x8x1xf32>
    %121 = vector.shape_cast %120 : vector<1x8x1xf32> to vector<8x1xf32>
    %122 = vector.shape_cast %90 : vector<8x1xf32> to vector<1x8x1xf32>
    tpu.vector_store %arg14[%c0_58, %c0_59, %c0_60], %122 {strides = array<i32>} : memref<1x8x1xf32, #tpu.memory_space<vmem>>, vector<1x8x1xf32>,
    return
  }
  func.func @transform_0(%arg0: i32, %arg1: i32) -> (i32, i32) {
    %c1_i32 = arith.constant 1 : i32
    %0 = arith.muli %arg0, %c1_i32 : i32
    %1 = arith.addi %0, %arg1 : i32
    %c0_i32 = arith.constant 0 : i32
    %c0_i32_0 = arith.constant 0 : i32
    return %1, %c0_i32 : i32, i32
  }
  func.func @transform_1(%arg0: i32, %arg1: i32) -> (i32, i32) {
    %c1_i32 = arith.constant 1 : i32
    %0 = arith.muli %arg0, %c1_i32 : i32
    %1 = arith.addi %0, %arg1 : i32
    %c0_i32 = arith.constant 0 : i32
    %c0_i32_0 = arith.constant 0 : i32
    return %c0_i32, %1 : i32, i32
  }
  func.func @transform_2(%arg0: i32, %arg1: i32) -> (i32, i32) {
    %c0_i32 = arith.constant 0 : i32
    %c0_i32_0 = arith.constant 0 : i32
    %c0_i32_1 = arith.constant 0 : i32
    return %c0_i32, %c0_i32_0 : i32, i32
  }
  func.func @transform_3(%arg0: i32, %arg1: i32) -> (i32, i32) {
    %c0_i32 = arith.constant 0 : i32
    %c0_i32_0 = arith.constant 0 : i32
    %c0_i32_1 = arith.constant 0 : i32
    return %c0_i32, %c0_i32_0 : i32, i32
  }
  func.func @transform_4(%arg0: i32, %arg1: i32) -> (i32, i32) {
    %c0_i32 = arith.constant 0 : i32
    %c0_i32_0 = arith.constant 0 : i32
    %c0_i32_1 = arith.constant 0 : i32
    return %c0_i32, %c0_i32_0 : i32, i32
  }
  func.func @transform_5(%arg0: i32, %arg1: i32) -> (i32, i32) {
    %c0_i32 = arith.constant 0 : i32
    %c0_i32_0 = arith.constant 0 : i32
    %c0_i32_1 = arith.constant 0 : i32
    return %c0_i32, %c0_i32_0 : i32, i32
  }
  func.func @transform_6(%arg0: i32, %arg1: i32) -> (i32, i32) {
    %c0_i32 = arith.constant 0 : i32
    %c0_i32_0 = arith.constant 0 : i32
    %c0_i32_1 = arith.constant 0 : i32
    return %c0_i32, %c0_i32_0 : i32, i32
  }
  func.func @transform_7(%arg0: i32, %arg1: i32) -> (i32, i32) {
    %c0_i32 = arith.constant 0 : i32
    %c0_i32_0 = arith.constant 0 : i32
    %c0_i32_1 = arith.constant 0 : i32
    return %c0_i32, %c0_i32_0 : i32, i32
  }
  func.func @transform_8(%arg0: i32, %arg1: i32) -> (i32, i32) {
    %c0_i32 = arith.constant 0 : i32
    %c0_i32_0 = arith.constant 0 : i32
    %c0_i32_1 = arith.constant 0 : i32
    return %c0_i32, %c0_i32_0 : i32, i32
  }
  func.func @transform_9(%arg0: i32, %arg1: i32) -> (i32, i32) {
    %c0_i32 = arith.constant 0 : i32
    %c0_i32_0 = arith.constant 0 : i32
    %c0_i32_1 = arith.constant 0 : i32
    return %c0_i32, %c0_i32_0 : i32, i32
  }
  func.func @transform_10(%arg0: i32, %arg1: i32) -> (i32, i32) {
    %c1_i32 = arith.constant 1 : i32
    %0 = arith.muli %arg0, %c1_i32 : i32
    %1 = arith.addi %0, %arg1 : i32
    %c0_i32 = arith.constant 0 : i32
    %c0_i32_0 = arith.constant 0 : i32
    return %1, %c0_i32 : i32, i32
  }
  func.func @transform_11(%arg0: i32, %arg1: i32) -> (i32, i32, i32) {
    %c0_i32 = arith.constant 0 : i32
    %c0_i32_0 = arith.constant 0 : i32
    %c0_i32_1 = arith.constant 0 : i32
    return %arg0, %c0_i32, %c0_i32_0 : i32, i32, i32
  }
  func.func @transform_12(%arg0: i32, %arg1: i32) -> (i32, i32, i32) {
    %c0_i32 = arith.constant 0 : i32
    %c0_i32_0 = arith.constant 0 : i32
    %c0_i32_1 = arith.constant 0 : i32
    return %arg0, %c0_i32, %c0_i32_0 : i32, i32, i32
  }
  func.func @transform_13(%arg0: i32, %arg1: i32) -> (i32, i32, i32) {
    %c0_i32 = arith.constant 0 : i32
    %c0_i32_0 = arith.constant 0 : i32
    %c0_i32_1 = arith.constant 0 : i32
    return %arg0, %c0_i32, %c0_i32_0 : i32, i32, i32
  }
}

</mosaic_0001>

<llo_original>
// kernel: tpu_custom_call.1
$region0: #{tpu_custom_call.1}
  #allocation0 [shape = 'u32[]', space=smem, size = 0x4, offset = 0x4, fixed_abs, tag = 'smem constant byte address 0x4 - core index']
  #allocation1 [shape = 'u32[144,128]{1,0:T(1,128)}', space=vmem, size = 0x12000, scoped, tag = 'internal scratch']
  #allocation2 [shape = 'f32[1,1]{1,0:T(1,128)S(1)}', space=vmem, size = 0x200, scoped, tag = 'scoped memory for tpu_custom_call.1']
  %s0 = inlined_call_operand.hbm [shape: bf16[512,128], index: 0, kind: input, shape index: {}]
  %s1 = inlined_call_operand.vmem [shape: s32[1,512], index: 1, kind: input, shape index: {}]
  %s2 = inlined_call_operand.vmem [shape: f32[1,128], index: 2, kind: input, shape index: {}]
  %s3 = inlined_call_operand.vmem [shape: f32[1,128], index: 3, kind: input, shape index: {}]
  %s4 = inlined_call_operand.hbm [shape: bf16[128,128], index: 4, kind: input, shape index: {}]
  %s5 = inlined_call_operand.vmem [shape: f32[1,128], index: 5, kind: input, shape index: {}]
  %s6 = inlined_call_operand.hbm [shape: bf16[128,128], index: 6, kind: input, shape index: {}]
  %s7 = inlined_call_operand.vmem [shape: f32[1,128], index: 7, kind: input, shape index: {}]
  %s8 = inlined_call_operand.vmem [shape: bf16[8,128], index: 8, kind: input, shape index: {}]
  %s9 = inlined_call_operand.<no memory space> [shape: f32[1,1], index: 9, kind: input, shape index: {}]
  %s10 = inlined_call_operand.hbm [shape: bf16[512,128], index: 10, kind: output, shape index: {0}]
  %s11 = inlined_call_operand.hbm [shape: f32[2,8,128], index: 11, kind: output, shape index: {1}]
  %s12 = inlined_call_operand.vmem [shape: f32[2,8,1], index: 12, kind: output, shape index: {2}]
  %s13 = inlined_call_operand.vmem [shape: f32[2,8,1], index: 13, kind: output, shape index: {3}]
  %14 = xla_tuple %s10, %s11, %s12, %s13
  %s15 = sld [smem:[#allocation0]]
  $region113: #{tpu_custom_call.1} parent=0
    _
  %s17 = ssub.s32 1, %s15
  %s18 = scalar_select 0, %s17, %s15
  %v19 = vstv %s9
  %20 = vst [vmem:[#allocation2] sm:$0x1] %v19
  $region1: #{tpu_custom_call.1} parent=0
    #allocation3 [shape = 'u8[131072]{0}', space=vmem, size = 0x20000, scoped, tag = 'input window, operand 0']
    #allocation4 [shape = 's32[2]{0}', space=sflag, size = 0x8, scoped, tag = 'scoped memory for tpu_custom_call.1']
    #allocation5 [shape = 's32[2]{0}', space=sflag, size = 0x8, scoped, tag = 'scoped memory for tpu_custom_call.1']
    #allocation6 [shape = 'u8[32768]{0}', space=vmem, size = 0x8000, scoped, tag = 'input window, operand 4, single buffered']
    #allocation7 [shape = 's32[1]{0}', space=sflag, size = 0x4, scoped, tag = 'scoped memory for tpu_custom_call.1']
    #allocation8 [shape = 'u8[32768]{0}', space=vmem, size = 0x8000, scoped, tag = 'input window, operand 6, single buffered']
    #allocation9 [shape = 'u8[131072]{0}', space=vmem, size = 0x20000, scoped, tag = 'output window, operand 0']
    #allocation10 [shape = 'u8[8192]{0}', space=vmem, size = 0x2000, scoped, tag = 'output window, operand 1']
    #allocation11 [shape = 's32[2]{0}', space=sflag, size = 0x8, scoped, tag = 'scoped memory for tpu_custom_call.1']
    %21 = vsyncpa [#allocation4], 0
    %s22 = scalar_lea.sflag [#allocation4], 1
    %23 = vsyncpa %s22, 0
    %24 = vsyncpa [#allocation7], 0
    %25 = vsyncpa [#allocation5], 0
    %s26 = scalar_lea.sflag [#allocation5], 1
    %27 = vsyncpa %s26, 0
    %28 = vsyncpa [#allocation11], 0
    %s29 = scalar_lea.sflag [#allocation11], 1
    %30 = vsyncpa %s29, 0
    loop: start=0, step=1, limit=4
    $region2: #{tpu_custom_call.1} parent=1 // loop_pre_header
      _
    $region3: #{tpu_custom_call.1} parent=1 // loop_header
      %s32 = sphi 0, %s36
      %p33 = scmp.ge.s32.totalorder %s32, 4
      %s39 = sphi 0, %s51
      %s40 = sphi 0, %s47
      %s41 = sphi 0, %s39
      %s42 = sphi 0, %s40
      %s43 = sphi 0, %s41
      %s44 = sphi 0, %s42
      %s56 = sphi 0, %s58
      %s59 = sphi 0, %s56
      %s60 = sphi 0, %s59
      %s76 = sphi 0, %s60
      %s84 = sphi 0, %s86
      %s87 = sphi 0, %s84
      %s88 = sphi 0, %s87
      %s104 = sphi 0, %s88
      %s108 = sphi 0, %s108
      %s110 = sphi 0, %s108
      %s111 = sphi 0, %s110
      %s125 = sphi 0, %s111
      %s129 = sphi 0, %s129
      %s131 = sphi 0, %s129
      %s132 = sphi 0, %s131
      %s146 = sphi 0, %s132
      %s150 = sphi 0, %s150
      %s152 = sphi 0, %s150
      %s153 = sphi 0, %s152
      %s167 = sphi 0, %s153
      %s171 = sphi 0, %s171
      %s173 = sphi 0, %s171
      %s174 = sphi 0, %s173
      %s188 = sphi 0, %s174
      %s192 = sphi 0, %s192
      %s194 = sphi 0, %s192
      %s195 = sphi 0, %s194
      %s209 = sphi 0, %s195
      %s213 = sphi 0, %s213
      %s215 = sphi 0, %s213
      %s216 = sphi 0, %s215
      %s230 = sphi 0, %s216
      %s234 = sphi 0, %s234
      %s236 = sphi 0, %s234
      %s237 = sphi 0, %s236
      %s251 = sphi 0, %s237
      %s255 = sphi 0, %s255
      %s257 = sphi 0, %s255
      %s258 = sphi 0, %s257
      %s272 = sphi 0, %s258
      %s280 = sphi 0, %s282
      %s283 = sphi 0, %s280
      %s284 = sphi 0, %s283
      %s300 = sphi 0, %s284
      %s306 = sphi 0, %s308
      %s309 = sphi 0, %s306
      %s310 = sphi 0, %s309
      %s326 = sphi 0, %s310
      %s332 = sphi 0, %s334
      %s335 = sphi 0, %s332
      %s336 = sphi 0, %s335
      %s352 = sphi 0, %s336
      %s358 = sphi 0, %s360
      %s361 = sphi 0, %s358
      %s362 = sphi 0, %s361
      %s378 = sphi 0, %s362
    $region4: #{tpu_custom_call.1} parent=1 // loop_header_branch
      %35 = sbr.rel (%p33) target = $region8
    $region5: #{tpu_custom_call.1} parent=1 // loop_body
      %s37 = ssub.s32 %s32, 1
      %s38 = ssub.s32 %s32, 2
      %s45 = sadd.s32 1, %s40
      %p46 = scmp.ge.s32.totalorder %s45, 1
      %s47 = scalar_select %p46, 0, %s45
      %s48 = sadd.s32 1, %s39
      %s49 = scalar_select %p46, %s48, %s39
      %p50 = scmp.ge.s32.totalorder %s49, 2
      %s51 = scalar_select %p50, 0, %s49
      %s52 = sadd.s32 %s39, %s40
      %s53 = sadd.s32 %s51, %s47
      %s54 = ssub.s32 %s52, %s53
      %p55 = scmp.eq.s32.totalorder %s54, 0
      %s57 = sadd.s32 %s56, 1
      %s58 = scalar_select %p55, %s56, %s57
      %p61 = pneg %p55
      %p62 = scmp.eq.s32.totalorder %s32, 1
      %p63 = por %p61, %p62
      %p64 = scmp.ne.s32.totalorder %s56, %s59
      %p65 = scmp.eq.s32.totalorder %s32, 0
      %p66 = por %p64, %p65
      %p67 = scmp.ne.s32.totalorder %s56, %s59
      %p68 = scmp.eq.s32.totalorder %s37, 1
      %p69 = por %p67, %p68
      %p70 = scmp.ne.s32.totalorder %s59, %s60
      %p71 = scmp.eq.s32.totalorder %s37, 0
      %p72 = por %p70, %p71
      %p73 = scmp.ne.s32.totalorder %s59, %s60
      %p74 = scmp.eq.s32.totalorder %s38, 1
      %p75 = por %p73, %p74
      %p77 = scmp.ne.s32.totalorder %s60, %s76
      %p78 = scmp.eq.s32.totalorder %s38, 0
      %p79 = por %p77, %p78
      %s80 = sadd.s32 %s39, %s40
      %s81 = sadd.s32 %s51, %s47
      %s82 = ssub.s32 %s80, %s81
      %p83 = scmp.eq.s32.totalorder %s82, 0
      %s85 = sadd.s32 %s84, 1
      %s86 = scalar_select %p83, %s84, %s85
      %p89 = pneg %p83
      %p90 = scmp.eq.s32.totalorder %s32, 1
      %p91 = por %p89, %p90
      %p92 = scmp.ne.s32.totalorder %s84, %s87
      %p93 = scmp.eq.s32.totalorder %s32, 0
      %p94 = por %p92, %p93
      %p95 = scmp.ne.s32.totalorder %s84, %s87
      %p96 = scmp.eq.s32.totalorder %s37, 1
      %p97 = por %p95, %p96
      %p98 = scmp.ne.s32.totalorder %s87, %s88
      %p99 = scmp.eq.s32.totalorder %s37, 0
      %p100 = por %p98, %p99
      %p101 = scmp.ne.s32.totalorder %s87, %s88
      %p102 = scmp.eq.s32.totalorder %s38, 1
      %p103 = por %p101, %p102
      %p105 = scmp.ne.s32.totalorder %s88, %s104
      %p106 = scmp.eq.s32.totalorder %s38, 0
      %p107 = por %p105, %p106
      %s109 = sadd.s32 %s108, 1
      %p112 = scmp.eq.s32.totalorder %s32, 1
      %p113 = scmp.ne.s32.totalorder %s108, %s110
      %p114 = scmp.eq.s32.totalorder %s32, 0
      %p115 = por %p113, %p114
      %p116 = scmp.ne.s32.totalorder %s108, %s110
      %p117 = scmp.eq.s32.totalorder %s37, 1
      %p118 = por %p116, %p117
      %p119 = scmp.ne.s32.totalorder %s110, %s111
      %p120 = scmp.eq.s32.totalorder %s37, 0
      %p121 = por %p119, %p120
      %p122 = scmp.ne.s32.totalorder %s110, %s111
      %p123 = scmp.eq.s32.totalorder %s38, 1
      %p124 = por %p122, %p123
      %p126 = scmp.ne.s32.totalorder %s111, %s125
      %p127 = scmp.eq.s32.totalorder %s38, 0
      %p128 = por %p126, %p127
      %s130 = sadd.s32 %s129, 1
      %p133 = scmp.eq.s32.totalorder %s32, 1
      %p134 = scmp.ne.s32.totalorder %s129, %s131
      %p135 = scmp.eq.s32.totalorder %s32, 0
      %p136 = por %p134, %p135
      %p137 = scmp.ne.s32.totalorder %s129, %s131
      %p138 = scmp.eq.s32.totalorder %s37, 1
      %p139 = por %p137, %p138
      %p140 = scmp.ne.s32.totalorder %s131, %s132
      %p141 = scmp.eq.s32.totalorder %s37, 0
      %p142 = por %p140, %p141
      %p143 = scmp.ne.s32.totalorder %s131, %s132
      %p144 = scmp.eq.s32.totalorder %s38, 1
      %p145 = por %p143, %p144
      %p147 = scmp.ne.s32.totalorder %s132, %s146
      %p148 = scmp.eq.s32.totalorder %s38, 0
      %p149 = por %p147, %p148
      %s151 = sadd.s32 %s150, 1
      %p154 = scmp.eq.s32.totalorder %s32, 1
      %p155 = scmp.ne.s32.totalorder %s150, %s152
      %p156 = scmp.eq.s32.totalorder %s32, 0
      %p157 = por %p155, %p156
      %p158 = scmp.ne.s32.totalorder %s150, %s152
      %p159 = scmp.eq.s32.totalorder %s37, 1
      %p160 = por %p158, %p159
      %p161 = scmp.ne.s32.totalorder %s152, %s153
      %p162 = scmp.eq.s32.totalorder %s37, 0
      %p163 = por %p161, %p162
      %p164 = scmp.ne.s32.totalorder %s152, %s153
      %p165 = scmp.eq.s32.totalorder %s38, 1
      %p166 = por %p164, %p165
      %p168 = scmp.ne.s32.totalorder %s153, %s167
      %p169 = scmp.eq.s32.totalorder %s38, 0
      %p170 = por %p168, %p169
      %s172 = sadd.s32 %s171, 1
      %p175 = scmp.eq.s32.totalorder %s32, 1
      %p176 = scmp.ne.s32.totalorder %s171, %s173
      %p177 = scmp.eq.s32.totalorder %s32, 0
      %p178 = por %p176, %p177
      %p179 = scmp.ne.s32.totalorder %s171, %s173
      %p180 = scmp.eq.s32.totalorder %s37, 1
      %p181 = por %p179, %p180
      %p182 = scmp.ne.s32.totalorder %s173, %s174
      %p183 = scmp.eq.s32.totalorder %s37, 0
      %p184 = por %p182, %p183
      %p185 = scmp.ne.s32.totalorder %s173, %s174
      %p186 = scmp.eq.s32.totalorder %s38, 1
      %p187 = por %p185, %p186
      %p189 = scmp.ne.s32.totalorder %s174, %s188
      %p190 = scmp.eq.s32.totalorder %s38, 0
      %p191 = por %p189, %p190
      %s193 = sadd.s32 %s192, 1
      %p196 = scmp.eq.s32.totalorder %s32, 1
      %p197 = scmp.ne.s32.totalorder %s192, %s194
      %p198 = scmp.eq.s32.totalorder %s32, 0
      %p199 = por %p197, %p198
      %p200 = scmp.ne.s32.totalorder %s192, %s194
      %p201 = scmp.eq.s32.totalorder %s37, 1
      %p202 = por %p200, %p201
      %p203 = scmp.ne.s32.totalorder %s194, %s195
      %p204 = scmp.eq.s32.totalorder %s37, 0
      %p205 = por %p203, %p204
      %p206 = scmp.ne.s32.totalorder %s194, %s195
      %p207 = scmp.eq.s32.totalorder %s38, 1
      %p208 = por %p206, %p207
      %p210 = scmp.ne.s32.totalorder %s195, %s209
      %p211 = scmp.eq.s32.totalorder %s38, 0
      %p212 = por %p210, %p211
      %s214 = sadd.s32 %s213, 1
      %p217 = scmp.eq.s32.totalorder %s32, 1
      %p218 = scmp.ne.s32.totalorder %s213, %s215
      %p219 = scmp.eq.s32.totalorder %s32, 0
      %p220 = por %p218, %p219
      %p221 = scmp.ne.s32.totalorder %s213, %s215
      %p222 = scmp.eq.s32.totalorder %s37, 1
      %p223 = por %p221, %p222
      %p224 = scmp.ne.s32.totalorder %s215, %s216
      %p225 = scmp.eq.s32.totalorder %s37, 0
      %p226 = por %p224, %p225
      %p227 = scmp.ne.s32.totalorder %s215, %s216
      %p228 = scmp.eq.s32.totalorder %s38, 1
      %p229 = por %p227, %p228
      %p231 = scmp.ne.s32.totalorder %s216, %s230
      %p232 = scmp.eq.s32.totalorder %s38, 0
      %p233 = por %p231, %p232
      %s235 = sadd.s32 %s234, 1
      %p238 = scmp.eq.s32.totalorder %s32, 1
      %p239 = scmp.ne.s32.totalorder %s234, %s236
      %p240 = scmp.eq.s32.totalorder %s32, 0
      %p241 = por %p239, %p240
      %p242 = scmp.ne.s32.totalorder %s234, %s236
      %p243 = scmp.eq.s32.totalorder %s37, 1
      %p244 = por %p242, %p243
      %p245 = scmp.ne.s32.totalorder %s236, %s237
      %p246 = scmp.eq.s32.totalorder %s37, 0
      %p247 = por %p245, %p246
      %p248 = scmp.ne.s32.totalorder %s236, %s237
      %p249 = scmp.eq.s32.totalorder %s38, 1
      %p250 = por %p248, %p249
      %p252 = scmp.ne.s32.totalorder %s237, %s251
      %p253 = scmp.eq.s32.totalorder %s38, 0
      %p254 = por %p252, %p253
      %s256 = sadd.s32 %s255, 1
      %p259 = scmp.eq.s32.totalorder %s32, 1
      %p260 = scmp.ne.s32.totalorder %s255, %s257
      %p261 = scmp.eq.s32.totalorder %s32, 0
      %p262 = por %p260, %p261
      %p263 = scmp.ne.s32.totalorder %s255, %s257
      %p264 = scmp.eq.s32.totalorder %s37, 1
      %p265 = por %p263, %p264
      %p266 = scmp.ne.s32.totalorder %s257, %s258
      %p267 = scmp.eq.s32.totalorder %s37, 0
      %p268 = por %p266, %p267
      %p269 = scmp.ne.s32.totalorder %s257, %s258
      %p270 = scmp.eq.s32.totalorder %s38, 1
      %p271 = por %p269, %p270
      %p273 = scmp.ne.s32.totalorder %s258, %s272
      %p274 = scmp.eq.s32.totalorder %s38, 0
      %p275 = por %p273, %p274
      %s276 = sadd.s32 %s39, %s40
      %s277 = sadd.s32 %s51, %s47
      %s278 = ssub.s32 %s276, %s277
      %p279 = scmp.eq.s32.totalorder %s278, 0
      %s281 = sadd.s32 %s280, 1
      %s282 = scalar_select %p279, %s280, %s281
      %p285 = pneg %p279
      %p286 = scmp.eq.s32.totalorder %s32, 1
      %p287 = por %p285, %p286
      %p288 = scmp.ne.s32.totalorder %s280, %s283
      %p289 = scmp.eq.s32.totalorder %s32, 0
      %p290 = por %p288, %p289
      %p291 = scmp.ne.s32.totalorder %s280, %s283
      %p292 = scmp.eq.s32.totalorder %s37, 1
      %p293 = por %p291, %p292
      %p294 = scmp.ne.s32.totalorder %s283, %s284
      %p295 = scmp.eq.s32.totalorder %s37, 0
      %p296 = por %p294, %p295
      %p297 = scmp.ne.s32.totalorder %s283, %s284
      %p298 = scmp.eq.s32.totalorder %s38, 1
      %p299 = por %p297, %p298
      %p301 = scmp.ne.s32.totalorder %s284, %s300
      %p302 = scmp.eq.s32.totalorder %s38, 0
      %p303 = por %p301, %p302
      %s304 = ssub.s32 %s39, %s51
      %p305 = scmp.eq.s32.totalorder %s304, 0
      %s307 = sadd.s32 %s306, 1
      %s308 = scalar_select %p305, %s306, %s307
      %p311 = pneg %p305
      %p312 = scmp.eq.s32.totalorder %s32, 1
      %p313 = por %p311, %p312
      %p314 = scmp.ne.s32.totalorder %s306, %s309
      %p315 = scmp.eq.s32.totalorder %s32, 0
      %p316 = por %p314, %p315
      %p317 = scmp.ne.s32.totalorder %s306, %s309
      %p318 = scmp.eq.s32.totalorder %s37, 1
      %p319 = por %p317, %p318
      %p320 = scmp.ne.s32.totalorder %s309, %s310
      %p321 = scmp.eq.s32.totalorder %s37, 0
      %p322 = por %p320, %p321
      %p323 = scmp.ne.s32.totalorder %s309, %s310
      %p324 = scmp.eq.s32.totalorder %s38, 1
      %p325 = por %p323, %p324
      %p327 = scmp.ne.s32.totalorder %s310, %s326
      %p328 = scmp.eq.s32.totalorder %s38, 0
      %p329 = por %p327, %p328
      %s330 = ssub.s32 %s39, %s51
      %p331 = scmp.eq.s32.totalorder %s330, 0
      %s333 = sadd.s32 %s332, 1
      %s334 = scalar_select %p331, %s332, %s333
      %p337 = pneg %p331
      %p338 = scmp.eq.s32.totalorder %s32, 1
      %p339 = por %p337, %p338
      %p340 = scmp.ne.s32.totalorder %s332, %s335
      %p341 = scmp.eq.s32.totalorder %s32, 0
      %p342 = por %p340, %p341
      %p343 = scmp.ne.s32.totalorder %s332, %s335
      %p344 = scmp.eq.s32.totalorder %s37, 1
      %p345 = por %p343, %p344
      %p346 = scmp.ne.s32.totalorder %s335, %s336
      %p347 = scmp.eq.s32.totalorder %s37, 0
      %p348 = por %p346, %p347
      %p349 = scmp.ne.s32.totalorder %s335, %s336
      %p350 = scmp.eq.s32.totalorder %s38, 1
      %p351 = por %p349, %p350
      %p353 = scmp.ne.s32.totalorder %s336, %s352
      %p354 = scmp.eq.s32.totalorder %s38, 0
      %p355 = por %p353, %p354
      %s356 = ssub.s32 %s39, %s51
      %p357 = scmp.eq.s32.totalorder %s356, 0
      %s359 = sadd.s32 %s358, 1
      %s360 = scalar_select %p357, %s358, %s359
      %p363 = pneg %p357
      %p364 = scmp.eq.s32.totalorder %s32, 1
      %p365 = por %p363, %p364
      %p366 = scmp.ne.s32.totalorder %s358, %s361
      %p367 = scmp.eq.s32.totalorder %s32, 0
      %p368 = por %p366, %p367
      %p369 = scmp.ne.s32.totalorder %s358, %s361
      %p370 = scmp.eq.s32.totalorder %s37, 1
      %p371 = por %p369, %p370
      %p372 = scmp.ne.s32.totalorder %s361, %s362
      %p373 = scmp.eq.s32.totalorder %s37, 0
      %p374 = por %p372, %p373
      %p375 = scmp.ne.s32.totalorder %s361, %s362
      %p376 = scmp.eq.s32.totalorder %s38, 1
      %p377 = por %p375, %p376
      %p379 = scmp.ne.s32.totalorder %s362, %s378
      %p380 = scmp.eq.s32.totalorder %s38, 0
      %p381 = por %p379, %p380
      %p382 = scmp.le.s32.totalorder 1, %s32
      %p383 = scmp.lt.s32.totalorder %s32, 3
      %p384 = pnand %p382, %p383
      %p385 = pneg %p384
      // Predicated region
      $region9: #{tpu_custom_call.1} parent=5 // pred_check
        _
      $region10: #{tpu_custom_call.1} parent=5 // pred_check_branch
        %387 = sbr.rel (%p384) target = $region12
      $region11: #{tpu_custom_call.1} parent=5 // pred_region
        %s388 = ssub.s32 %s32, 1
        // Predicated region
        $region13: #{tpu_custom_call.1} parent=11 // pred_check
          %p389 = pneg %p121
        $region14: #{tpu_custom_call.1} parent=11 // pred_check_branch
          %391 = sbr.rel (%p389) target = $region16
        $region15: #{tpu_custom_call.1} parent=11 // pred_region
          _
        $region16: #{tpu_custom_call.1} parent=11 // pred_fallthru
          _
        // Predicated region
        $region17: #{tpu_custom_call.1} parent=11 // pred_check
          %p392 = pneg %p142
        $region18: #{tpu_custom_call.1} parent=11 // pred_check_branch
          %394 = sbr.rel (%p392) target = $region20
        $region19: #{tpu_custom_call.1} parent=11 // pred_region
          _
        $region20: #{tpu_custom_call.1} parent=11 // pred_fallthru
          _
        // Predicated region
        $region21: #{tpu_custom_call.1} parent=11 // pred_check
          %p395 = pneg %p163
        $region22: #{tpu_custom_call.1} parent=11 // pred_check_branch
          %397 = sbr.rel (%p395) target = $region24
        $region23: #{tpu_custom_call.1} parent=11 // pred_region
          %s399 = ssub.s32 1024, 1024
          %400 = vsyncadd [#allocation7], %s399
          %s401 = sshll.u32 [#allocation6], 4
          %s402 = int_to_ptr.vmem [resolvable:$true] %s401
          %407 = dma.hbm_to_vmem [thread:$0]  %s4, 1024, %s402, [#allocation7], 64, 64, 4
        $region24: #{tpu_custom_call.1} parent=11 // pred_fallthru
          _
        // Predicated region
        $region25: #{tpu_custom_call.1} parent=11 // pred_check
          %p408 = pneg %p184
        $region26: #{tpu_custom_call.1} parent=11 // pred_check_branch
          %410 = sbr.rel (%p408) target = $region28
        $region27: #{tpu_custom_call.1} parent=11 // pred_region
          _
        $region28: #{tpu_custom_call.1} parent=11 // pred_fallthru
          _
        // Predicated region
        $region29: #{tpu_custom_call.1} parent=11 // pred_check
          %p411 = pneg %p205
        $region30: #{tpu_custom_call.1} parent=11 // pred_check_branch
          %413 = sbr.rel (%p411) target = $region32
        $region31: #{tpu_custom_call.1} parent=11 // pred_region
          %s415 = ssub.s32 1024, 1024
          %416 = vsyncadd [#allocation7], %s415
          %s417 = sshll.u32 [#allocation8], 4
          %s418 = int_to_ptr.vmem [resolvable:$true] %s417
          %423 = dma.hbm_to_vmem [thread:$0]  %s6, 1024, %s418, [#allocation7], 64, 64, 4
        $region32: #{tpu_custom_call.1} parent=11 // pred_fallthru
          _
        // Predicated region
        $region33: #{tpu_custom_call.1} parent=11 // pred_check
          %p424 = pneg %p226
        $region34: #{tpu_custom_call.1} parent=11 // pred_check_branch
          %426 = sbr.rel (%p424) target = $region36
        $region35: #{tpu_custom_call.1} parent=11 // pred_region
          _
        $region36: #{tpu_custom_call.1} parent=11 // pred_fallthru
          _
        // Predicated region
        $region37: #{tpu_custom_call.1} parent=11 // pred_check
          %p427 = pneg %p247
        $region38: #{tpu_custom_call.1} parent=11 // pred_check_branch
          %429 = sbr.rel (%p427) target = $region40
        $region39: #{tpu_custom_call.1} parent=11 // pred_region
          _
        $region40: #{tpu_custom_call.1} parent=11 // pred_fallthru
          _
        // Predicated region
        $region41: #{tpu_custom_call.1} parent=11 // pred_check
          %p430 = pneg %p268
        $region42: #{tpu_custom_call.1} parent=11 // pred_check_branch
          %432 = sbr.rel (%p430) target = $region44
        $region43: #{tpu_custom_call.1} parent=11 // pred_region
          _
        $region44: #{tpu_custom_call.1} parent=11 // pred_fallthru
          _
      $region12: #{tpu_custom_call.1} parent=5 // pred_fallthru
        _
      %p433 = scmp.lt.s32.totalorder %s32, 2
      // Predicated region
      $region45: #{tpu_custom_call.1} parent=5 // pred_check
        %p434 = pneg %p433
      $region46: #{tpu_custom_call.1} parent=5 // pred_check_branch
        %436 = sbr.rel (%p434) target = $region48
      $region47: #{tpu_custom_call.1} parent=5 // pred_region
        // Predicated region
        $region49: #{tpu_custom_call.1} parent=47 // pred_check
          %p437 = pneg %p66
        $region50: #{tpu_custom_call.1} parent=47 // pred_check_branch
          %439 = sbr.rel (%p437) target = $region52
        $region51: #{tpu_custom_call.1} parent=47 // pred_region
          %s440 = sand.u32 %s56, 1
          %s441 = scalar_lea.sflag [#allocation4], %s440
          %s442 = sand.u32 %s56, 1
          %s443 = smul.addr %s442, 128
          %s444 = scalar_lea.vmem [#allocation3], %s443
          %s445 = sadd.s32 %s39, %s40
          %s446 = smul.u32 32, %s445
          %s448 = ssub.s32 2048, 2048
          %449 = vsyncadd %s441, %s448
          %s450 = smul.addr %s446, 64
          %s451 = scalar_lea.hbm %s0, %s450
          %s452 = sshll.u32 %s444, 4
          %s453 = int_to_ptr.vmem [resolvable:$true] %s452
          %458 = dma.hbm_to_vmem [thread:$0]  %s451, 2048, %s453, %s441, 64, 64, 4
        $region52: #{tpu_custom_call.1} parent=47 // pred_fallthru
          _
        // Predicated region
        $region53: #{tpu_custom_call.1} parent=47 // pred_check
          %p459 = pneg %p94
        $region54: #{tpu_custom_call.1} parent=47 // pred_check_branch
          %461 = sbr.rel (%p459) target = $region56
        $region55: #{tpu_custom_call.1} parent=47 // pred_region
          %s462 = sadd.s32 %s39, %s40
          %s463 = smul.u32 2, %s462
          %p464 = scmp.lt.s32.totalorder %s463, 3
          %s465 = scalar_select %p464, %s463, 3
          %s466 = scalar_lea.vmem %s1, %s465
          %s467 = sadd.s32 %s39, %s40
          %s468 = smul.u32 2, %s467
        $region56: #{tpu_custom_call.1} parent=47 // pred_fallthru
          _
      $region48: #{tpu_custom_call.1} parent=5 // pred_fallthru
        _
      %p469 = scmp.le.s32.totalorder 1, %s32
      %p470 = scmp.lt.s32.totalorder %s32, 3
      %p471 = pnand %p469, %p470
      %p472 = pneg %p471
      // Predicated region
      $region57: #{tpu_custom_call.1} parent=5 // pred_check
        _
      $region58: #{tpu_custom_call.1} parent=5 // pred_check_branch
        %474 = sbr.rel (%p471) target = $region60
      $region59: #{tpu_custom_call.1} parent=5 // pred_region
        %s475 = ssub.s32 %s32, 1
        %s476 = sand.u32 %s59, 1
        %s477 = scalar_lea.sflag [#allocation4], %s476
        %s478 = sand.u32 %s59, 1
        %s479 = smul.addr %s478, 128
        %s480 = scalar_lea.vmem [#allocation3], %s479
        // Predicated region
        $region61: #{tpu_custom_call.1} parent=59 // pred_check
          %p481 = pneg %p72
        $region62: #{tpu_custom_call.1} parent=59 // pred_check_branch
          %483 = sbr.rel (%p481) target = $region64
        $region63: #{tpu_custom_call.1} parent=59 // pred_region
          %484 = dma.done %s477, 2048
        $region64: #{tpu_custom_call.1} parent=59 // pred_fallthru
          _
        // Predicated region
        $region65: #{tpu_custom_call.1} parent=59 // pred_check
          %p485 = pneg %p163
        $region66: #{tpu_custom_call.1} parent=59 // pred_check_branch
          %487 = sbr.rel (%p485) target = $region68
        $region67: #{tpu_custom_call.1} parent=59 // pred_region
          %488 = dma.done [#allocation7], 1024
        $region68: #{tpu_custom_call.1} parent=59 // pred_fallthru
          _
        // Predicated region
        $region69: #{tpu_custom_call.1} parent=59 // pred_check
          %p489 = pneg %p205
        $region70: #{tpu_custom_call.1} parent=59 // pred_check_branch
          %491 = sbr.rel (%p489) target = $region72
        $region71: #{tpu_custom_call.1} parent=59 // pred_region
          %492 = dma.done [#allocation7], 1024
        $region72: #{tpu_custom_call.1} parent=59 // pred_fallthru
          _
        %s493 = sand.u32 %s59, 1
        %s494 = scalar_lea.sflag [#allocation4], %s493
        %s495 = sand.u32 %s59, 1
        %s496 = smul.addr %s495, 128
        %s497 = scalar_lea.vmem [#allocation3], %s496
        %p498 = pneg %p72
        %p499 = pneg %p69
        %s500 = sadd.s32 %s41, %s42
        %s501 = smul.u32 2, %s500
        %p502 = scmp.lt.s32.totalorder %s501, 3
        %s503 = scalar_select %p502, %s501, 3
        %s504 = scalar_lea.vmem %s1, %s503
        %p505 = pneg %p100
        %p506 = pneg %p97
        %p507 = pneg %p121
        %p508 = pneg %p118
        %p509 = pneg %p142
        %p510 = pneg %p139
        %p511 = pneg %p163
        %p512 = pneg %p160
        %p513 = pneg %p184
        %p514 = pneg %p181
        %p515 = pneg %p205
        %p516 = pneg %p202
        %p517 = pneg %p226
        %p518 = pneg %p223
        %p519 = pneg %p247
        %p520 = pneg %p244
        %p521 = pneg %p268
        %p522 = pneg %p265
        %p523 = pneg %p296
        %p524 = pneg %p293
        %s525 = sand.u32 %s283, 1
        %s526 = scalar_lea.sflag [#allocation5], %s525
        %s527 = sand.u32 %s283, 1
        %s528 = smul.addr %s527, 128
        %s529 = scalar_lea.vmem [#allocation9], %s528
        %p530 = pneg %p322
        %p531 = pneg %p319
        %s532 = sand.u32 %s309, 1
        %s533 = scalar_lea.sflag [#allocation11], %s532
        %s534 = sand.u32 %s309, 1
        %s535 = smul.addr %s534, 8
        %s536 = scalar_lea.vmem [#allocation10], %s535
        %p537 = pneg %p348
        %p538 = pneg %p345
        %p539 = scmp.lt.s32.totalorder %s41, 1
        %s540 = scalar_select %p539, %s41, 1
        %s541 = smul.addr %s540, 8
        %s542 = scalar_lea.vmem %s12, %s541
        %p543 = pneg %p374
        %p544 = pneg %p371
        %p545 = scmp.lt.s32.totalorder %s41, 1
        %s546 = scalar_select %p545, %s41, 1
        %s547 = smul.addr %s546, 8
        %s548 = scalar_lea.vmem %s13, %s547
        %s549 = sadd.s32 %s41, %s42
        %s550 = smul.u32 32, %s549
        %s551 = sadd.s32 %s41, %s42
        %s552 = smul.u32 2, %s551
        %p553 = scmp.lt.s32.totalorder %s552, 3
        %s554 = scalar_select %p553, %s552, 3
        %s555 = scalar_lea.vmem %s1, %s554
        %s556 = sadd.s32 %s41, %s42
        %s557 = smul.u32 2, %s556
        %s558 = sadd.s32 %s41, %s42
        %s559 = smul.u32 32, %s558
        %p560 = scmp.lt.s32.totalorder %s41, 1
        %s561 = scalar_select %p560, %s41, 1
        %s562 = smul.addr %s561, 8
        %s563 = scalar_lea.vmem %s12, %s562
        %p564 = scmp.lt.s32.totalorder %s41, 1
        %s565 = scalar_select %p564, %s41, 1
        %s566 = smul.addr %s565, 8
        %s567 = scalar_lea.vmem %s13, %s566
        %p573 = scmp.eq.s32.totalorder %s42, 0
        // Predicated region
        $region73: #{tpu_custom_call.1} parent=59 // pred_check
          %p574 = pneg %p573
        $region74: #{tpu_custom_call.1} parent=59 // pred_check_branch
          %576 = sbr.rel (%p574) target = $region76
        $region75: #{tpu_custom_call.1} parent=59 // pred_region
          %577 = vst [vmem:[%s536] sm:$0xff] 0.0
          %vm578 = vcmask 7168
          %579 = vst.msk [vmem:[%s563] sm:$0xff] %vm578, -1e+30
          %580 = vst.msk [vmem:[%s567] sm:$0xff] %vm578, 0.0
        $region76: #{tpu_custom_call.1} parent=59 // pred_fallthru
          _
        %v581 = vld [vmem:[%s480] sm:$0xf]
        %v582 = vld [vmem:[%s480 + $0x4] sm:$0xf]
        %v583 = vld [vmem:[%s480 + $0x8] sm:$0xf]
        %v584 = vld [vmem:[%s480 + $0xc] sm:$0xf]
        %v585 = vld [vmem:[%s480 + $0x10] sm:$0xf]
        %v586 = vld [vmem:[%s480 + $0x14] sm:$0xf]
        %v587 = vld [vmem:[%s480 + $0x18] sm:$0xf]
        %v588 = vld [vmem:[%s480 + $0x1c] sm:$0xf]
        %v589 = vld [vmem:[%s480 + $0x20] sm:$0xf]
        %v590 = vld [vmem:[%s480 + $0x24] sm:$0xf]
        %v591 = vld [vmem:[%s480 + $0x28] sm:$0xf]
        %v592 = vld [vmem:[%s480 + $0x2c] sm:$0xf]
        %v593 = vld [vmem:[%s480 + $0x30] sm:$0xf]
        %v594 = vld [vmem:[%s480 + $0x34] sm:$0xf]
        %v595 = vld [vmem:[%s480 + $0x38] sm:$0xf]
        %v596 = vld [vmem:[%s480 + $0x3c] sm:$0xf]
        %v597 = vld [vmem:[%s480 + $0x40] sm:$0xf]
        %v598 = vld [vmem:[%s480 + $0x44] sm:$0xf]
        %v599 = vld [vmem:[%s480 + $0x48] sm:$0xf]
        %v600 = vld [vmem:[%s480 + $0x4c] sm:$0xf]
        %v601 = vld [vmem:[%s480 + $0x50] sm:$0xf]
        %v602 = vld [vmem:[%s480 + $0x54] sm:$0xf]
        %v603 = vld [vmem:[%s480 + $0x58] sm:$0xf]
        %v604 = vld [vmem:[%s480 + $0x5c] sm:$0xf]
        %v605 = vld [vmem:[%s480 + $0x60] sm:$0xf]
        %v606 = vld [vmem:[%s480 + $0x64] sm:$0xf]
        %v607 = vld [vmem:[%s480 + $0x68] sm:$0xf]
        %v608 = vld [vmem:[%s480 + $0x6c] sm:$0xf]
        %v609 = vld [vmem:[%s480 + $0x70] sm:$0xf]
        %v610 = vld [vmem:[%s480 + $0x74] sm:$0xf]
        %v611 = vld [vmem:[%s480 + $0x78] sm:$0xf]
        %v612 = vld [vmem:[%s480 + $0x7c] sm:$0xf]
        %v613 = vunpack.c.l.bf16 %v581
        %v614 = vunpack.c.l.bf16 %v582
        %v615 = vunpack.c.l.bf16 %v583
        %v616 = vunpack.c.l.bf16 %v584
        %v617 = vunpack.c.l.bf16 %v585
        %v618 = vunpack.c.l.bf16 %v586
        %v619 = vunpack.c.l.bf16 %v587
        %v620 = vunpack.c.l.bf16 %v588
        %v621 = vunpack.c.l.bf16 %v589
        %v622 = vunpack.c.l.bf16 %v590
        %v623 = vunpack.c.l.bf16 %v591
        %v624 = vunpack.c.l.bf16 %v592
        %v625 = vunpack.c.l.bf16 %v593
        %v626 = vunpack.c.l.bf16 %v594
        %v627 = vunpack.c.l.bf16 %v595
        %v628 = vunpack.c.l.bf16 %v596
        %v629 = vunpack.c.l.bf16 %v597
        %v630 = vunpack.c.l.bf16 %v598
        %v631 = vunpack.c.l.bf16 %v599
        %v632 = vunpack.c.l.bf16 %v600
        %v633 = vunpack.c.l.bf16 %v601
        %v634 = vunpack.c.l.bf16 %v602
        %v635 = vunpack.c.l.bf16 %v603
        %v636 = vunpack.c.l.bf16 %v604
        %v637 = vunpack.c.l.bf16 %v605
        %v638 = vunpack.c.l.bf16 %v606
        %v639 = vunpack.c.l.bf16 %v607
        %v640 = vunpack.c.l.bf16 %v608
        %v641 = vunpack.c.l.bf16 %v609
        %v642 = vunpack.c.l.bf16 %v610
        %v643 = vunpack.c.l.bf16 %v611
        %v644 = vunpack.c.l.bf16 %v612
        %645 = vadd.xlane.f32.xlu0 %v613
        %v646 = vpop.xlane.xlu0 %645
        %647 = vadd.xlane.f32.xlu0 %v614
        %v648 = vpop.xlane.xlu0 %647
        %649 = vadd.xlane.f32.xlu0 %v615
        %v650 = vpop.xlane.xlu0 %649
        %651 = vadd.xlane.f32.xlu0 %v616
        %v652 = vpop.xlane.xlu0 %651
        %653 = vadd.xlane.f32.xlu0 %v617
        %v654 = vpop.xlane.xlu0 %653
        %655 = vadd.xlane.f32.xlu0 %v618
        %v656 = vpop.xlane.xlu0 %655
        %657 = vadd.xlane.f32.xlu0 %v619
        %v658 = vpop.xlane.xlu0 %657
        %659 = vadd.xlane.f32.xlu0 %v620
        %v660 = vpop.xlane.xlu0 %659
        %661 = vadd.xlane.f32.xlu0 %v621
        %v662 = vpop.xlane.xlu0 %661
        %663 = vadd.xlane.f32.xlu0 %v622
        %v664 = vpop.xlane.xlu0 %663
        %665 = vadd.xlane.f32.xlu0 %v623
        %v666 = vpop.xlane.xlu0 %665
        %667 = vadd.xlane.f32.xlu0 %v624
        %v668 = vpop.xlane.xlu0 %667
        %669 = vadd.xlane.f32.xlu0 %v625
        %v670 = vpop.xlane.xlu0 %669
        %671 = vadd.xlane.f32.xlu0 %v626
        %v672 = vpop.xlane.xlu0 %671
        %673 = vadd.xlane.f32.xlu0 %v627
        %v674 = vpop.xlane.xlu0 %673
        %675 = vadd.xlane.f32.xlu0 %v628
        %v676 = vpop.xlane.xlu0 %675
        %677 = vadd.xlane.f32.xlu0 %v629
        %v678 = vpop.xlane.xlu0 %677
        %679 = vadd.xlane.f32.xlu0 %v630
        %v680 = vpop.xlane.xlu0 %679
        %681 = vadd.xlane.f32.xlu0 %v631
        %v682 = vpop.xlane.xlu0 %681
        %683 = vadd.xlane.f32.xlu0 %v632
        %v684 = vpop.xlane.xlu0 %683
        %685 = vadd.xlane.f32.xlu0 %v633
        %v686 = vpop.xlane.xlu0 %685
        %687 = vadd.xlane.f32.xlu0 %v634
        %v688 = vpop.xlane.xlu0 %687
        %689 = vadd.xlane.f32.xlu0 %v635
        %v690 = vpop.xlane.xlu0 %689
        %691 = vadd.xlane.f32.xlu0 %v636
        %v692 = vpop.xlane.xlu0 %691
        %693 = vadd.xlane.f32.xlu0 %v637
        %v694 = vpop.xlane.xlu0 %693
        %695 = vadd.xlane.f32.xlu0 %v638
        %v696 = vpop.xlane.xlu0 %695
        %697 = vadd.xlane.f32.xlu0 %v639
        %v698 = vpop.xlane.xlu0 %697
        %699 = vadd.xlane.f32.xlu0 %v640
        %v700 = vpop.xlane.xlu0 %699
        %701 = vadd.xlane.f32.xlu0 %v641
        %v702 = vpop.xlane.xlu0 %701
        %703 = vadd.xlane.f32.xlu0 %v642
        %v704 = vpop.xlane.xlu0 %703
        %705 = vadd.xlane.f32.xlu0 %v643
        %v706 = vpop.xlane.xlu0 %705
        %707 = vadd.xlane.f32.xlu0 %v644
        %v708 = vpop.xlane.xlu0 %707
        %v709 = vrcp.pop 128.0
        %v710 = vmul.f32 %v646, %v709
        %v711 = vmul.f32 %v648, %v709
        %v712 = vmul.f32 %v650, %v709
        %v713 = vmul.f32 %v652, %v709
        %v714 = vmul.f32 %v654, %v709
        %v715 = vmul.f32 %v656, %v709
        %v716 = vmul.f32 %v658, %v709
        %v717 = vmul.f32 %v660, %v709
        %v718 = vmul.f32 %v662, %v709
        %v719 = vmul.f32 %v664, %v709
        %v720 = vmul.f32 %v666, %v709
        %v721 = vmul.f32 %v668, %v709
        %v722 = vmul.f32 %v670, %v709
        %v723 = vmul.f32 %v672, %v709
        %v724 = vmul.f32 %v674, %v709
        %v725 = vmul.f32 %v676, %v709
        %v726 = vmul.f32 %v678, %v709
        %v727 = vmul.f32 %v680, %v709
        %v728 = vmul.f32 %v682, %v709
        %v729 = vmul.f32 %v684, %v709
        %v730 = vmul.f32 %v686, %v709
        %v731 = vmul.f32 %v688, %v709
        %v732 = vmul.f32 %v690, %v709
        %v733 = vmul.f32 %v692, %v709
        %v734 = vmul.f32 %v694, %v709
        %v735 = vmul.f32 %v696, %v709
        %v736 = vmul.f32 %v698, %v709
        %v737 = vmul.f32 %v700, %v709
        %v738 = vmul.f32 %v702, %v709
        %v739 = vmul.f32 %v704, %v709
        %v740 = vmul.f32 %v706, %v709
        %v741 = vmul.f32 %v708, %v709
        %v742 = vmul.f32 %v613, %v613
        %v743 = vmul.f32 %v614, %v614
        %v744 = vmul.f32 %v615, %v615
        %v745 = vmul.f32 %v616, %v616
        %v746 = vmul.f32 %v617, %v617
        %v747 = vmul.f32 %v618, %v618
        %v748 = vmul.f32 %v619, %v619
        %v749 = vmul.f32 %v620, %v620
        %v750 = vmul.f32 %v621, %v621
        %v751 = vmul.f32 %v622, %v622
        %v752 = vmul.f32 %v623, %v623
        %v753 = vmul.f32 %v624, %v624
        %v754 = vmul.f32 %v625, %v625
        %v755 = vmul.f32 %v626, %v626
        %v756 = vmul.f32 %v627, %v627
        %v757 = vmul.f32 %v628, %v628
        %v758 = vmul.f32 %v629, %v629
        %v759 = vmul.f32 %v630, %v630
        %v760 = vmul.f32 %v631, %v631
        %v761 = vmul.f32 %v632, %v632
        %v762 = vmul.f32 %v633, %v633
        %v763 = vmul.f32 %v634, %v634
        %v764 = vmul.f32 %v635, %v635
        %v765 = vmul.f32 %v636, %v636
        %v766 = vmul.f32 %v637, %v637
        %v767 = vmul.f32 %v638, %v638
        %v768 = vmul.f32 %v639, %v639
        %v769 = vmul.f32 %v640, %v640
        %v770 = vmul.f32 %v641, %v641
        %v771 = vmul.f32 %v642, %v642
        %v772 = vmul.f32 %v643, %v643
        %v773 = vmul.f32 %v644, %v644
        %774 = vadd.xlane.f32.xlu0 %v742
        %v775 = vpop.xlane.xlu0 %774
        %776 = vadd.xlane.f32.xlu0 %v743
        %v777 = vpop.xlane.xlu0 %776
        %778 = vadd.xlane.f32.xlu0 %v744
        %v779 = vpop.xlane.xlu0 %778
        %780 = vadd.xlane.f32.xlu0 %v745
        %v781 = vpop.xlane.xlu0 %780
        %782 = vadd.xlane.f32.xlu0 %v746
        %v783 = vpop.xlane.xlu0 %782
        %784 = vadd.xlane.f32.xlu0 %v747
        %v785 = vpop.xlane.xlu0 %784
        %786 = vadd.xlane.f32.xlu0 %v748
        %v787 = vpop.xlane.xlu0 %786
        %788 = vadd.xlane.f32.xlu0 %v749
        %v789 = vpop.xlane.xlu0 %788
        %790 = vadd.xlane.f32.xlu0 %v750
        %v791 = vpop.xlane.xlu0 %790
        %792 = vadd.xlane.f32.xlu0 %v751
        %v793 = vpop.xlane.xlu0 %792
        %794 = vadd.xlane.f32.xlu0 %v752
        %v795 = vpop.xlane.xlu0 %794
        %796 = vadd.xlane.f32.xlu0 %v753
        %v797 = vpop.xlane.xlu0 %796
        %798 = vadd.xlane.f32.xlu0 %v754
        %v799 = vpop.xlane.xlu0 %798
        %800 = vadd.xlane.f32.xlu0 %v755
        %v801 = vpop.xlane.xlu0 %800
        %802 = vadd.xlane.f32.xlu0 %v756
        %v803 = vpop.xlane.xlu0 %802
        %804 = vadd.xlane.f32.xlu0 %v757
        %v805 = vpop.xlane.xlu0 %804
        %806 = vadd.xlane.f32.xlu0 %v758
        %v807 = vpop.xlane.xlu0 %806
        %808 = vadd.xlane.f32.xlu0 %v759
        %v809 = vpop.xlane.xlu0 %808
        %810 = vadd.xlane.f32.xlu0 %v760
        %v811 = vpop.xlane.xlu0 %810
        %812 = vadd.xlane.f32.xlu0 %v761
        %v813 = vpop.xlane.xlu0 %812
        %814 = vadd.xlane.f32.xlu0 %v762
        %v815 = vpop.xlane.xlu0 %814
        %816 = vadd.xlane.f32.xlu0 %v763
        %v817 = vpop.xlane.xlu0 %816
        %818 = vadd.xlane.f32.xlu0 %v764
        %v819 = vpop.xlane.xlu0 %818
        %820 = vadd.xlane.f32.xlu0 %v765
        %v821 = vpop.xlane.xlu0 %820
        %822 = vadd.xlane.f32.xlu0 %v766
        %v823 = vpop.xlane.xlu0 %822
        %824 = vadd.xlane.f32.xlu0 %v767
        %v825 = vpop.xlane.xlu0 %824
        %826 = vadd.xlane.f32.xlu0 %v768
        %v827 = vpop.xlane.xlu0 %826
        %828 = vadd.xlane.f32.xlu0 %v769
        %v829 = vpop.xlane.xlu0 %828
        %830 = vadd.xlane.f32.xlu0 %v770
        %v831 = vpop.xlane.xlu0 %830
        %832 = vadd.xlane.f32.xlu0 %v771
        %v833 = vpop.xlane.xlu0 %832
        %834 = vadd.xlane.f32.xlu0 %v772
        %v835 = vpop.xlane.xlu0 %834
        %836 = vadd.xlane.f32.xlu0 %v773
        %v837 = vpop.xlane.xlu0 %836
        %v838 = vmul.f32 %v775, %v709
        %v839 = vmul.f32 %v777, %v709
        %v840 = vmul.f32 %v779, %v709
        %v841 = vmul.f32 %v781, %v709
        %v842 = vmul.f32 %v783, %v709
        %v843 = vmul.f32 %v785, %v709
        %v844 = vmul.f32 %v787, %v709
        %v845 = vmul.f32 %v789, %v709
        %v846 = vmul.f32 %v791, %v709
        %v847 = vmul.f32 %v793, %v709
        %v848 = vmul.f32 %v795, %v709
        %v849 = vmul.f32 %v797, %v709
        %v850 = vmul.f32 %v799, %v709
        %v851 = vmul.f32 %v801, %v709
        %v852 = vmul.f32 %v803, %v709
        %v853 = vmul.f32 %v805, %v709
        %v854 = vmul.f32 %v807, %v709
        %v855 = vmul.f32 %v809, %v709
        %v856 = vmul.f32 %v811, %v709
        %v857 = vmul.f32 %v813, %v709
        %v858 = vmul.f32 %v815, %v709
        %v859 = vmul.f32 %v817, %v709
        %v860 = vmul.f32 %v819, %v709
        %v861 = vmul.f32 %v821, %v709
        %v862 = vmul.f32 %v823, %v709
        %v863 = vmul.f32 %v825, %v709
        %v864 = vmul.f32 %v827, %v709
        %v865 = vmul.f32 %v829, %v709
        %v866 = vmul.f32 %v831, %v709
        %v867 = vmul.f32 %v833, %v709
        %v868 = vmul.f32 %v835, %v709
        %v869 = vmul.f32 %v837, %v709
        %v870 = vmul.f32 %v710, %v710
        %v871 = vmul.f32 %v711, %v711
        %v872 = vmul.f32 %v712, %v712
        %v873 = vmul.f32 %v713, %v713
        %v874 = vmul.f32 %v714, %v714
        %v875 = vmul.f32 %v715, %v715
        %v876 = vmul.f32 %v716, %v716
        %v877 = vmul.f32 %v717, %v717
        %v878 = vmul.f32 %v718, %v718
        %v879 = vmul.f32 %v719, %v719
        %v880 = vmul.f32 %v720, %v720
        %v881 = vmul.f32 %v721, %v721
        %v882 = vmul.f32 %v722, %v722
        %v883 = vmul.f32 %v723, %v723
        %v884 = vmul.f32 %v724, %v724
        %v885 = vmul.f32 %v725, %v725
        %v886 = vmul.f32 %v726, %v726
        %v887 = vmul.f32 %v727, %v727
        %v888 = vmul.f32 %v728, %v728
        %v889 = vmul.f32 %v729, %v729
        %v890 = vmul.f32 %v730, %v730
        %v891 = vmul.f32 %v731, %v731
        %v892 = vmul.f32 %v732, %v732
        %v893 = vmul.f32 %v733, %v733
        %v894 = vmul.f32 %v734, %v734
        %v895 = vmul.f32 %v735, %v735
        %v896 = vmul.f32 %v736, %v736
        %v897 = vmul.f32 %v737, %v737
        %v898 = vmul.f32 %v738, %v738
        %v899 = vmul.f32 %v739, %v739
        %v900 = vmul.f32 %v740, %v740
        %v901 = vmul.f32 %v741, %v741
        %v902 = vsub.f32 %v838, %v870
        %v903 = vsub.f32 %v839, %v871
        %v904 = vsub.f32 %v840, %v872
        %v905 = vsub.f32 %v841, %v873
        %v906 = vsub.f32 %v842, %v874
        %v907 = vsub.f32 %v843, %v875
        %v908 = vsub.f32 %v844, %v876
        %v909 = vsub.f32 %v845, %v877
        %v910 = vsub.f32 %v846, %v878
        %v911 = vsub.f32 %v847, %v879
        %v912 = vsub.f32 %v848, %v880
        %v913 = vsub.f32 %v849, %v881
        %v914 = vsub.f32 %v850, %v882
        %v915 = vsub.f32 %v851, %v883
        %v916 = vsub.f32 %v852, %v884
        %v917 = vsub.f32 %v853, %v885
        %v918 = vsub.f32 %v854, %v886
        %v919 = vsub.f32 %v855, %v887
        %v920 = vsub.f32 %v856, %v888
        %v921 = vsub.f32 %v857, %v889
        %v922 = vsub.f32 %v858, %v890
        %v923 = vsub.f32 %v859, %v891
        %v924 = vsub.f32 %v860, %v892
        %v925 = vsub.f32 %v861, %v893
        %v926 = vsub.f32 %v862, %v894
        %v927 = vsub.f32 %v863, %v895
        %v928 = vsub.f32 %v864, %v896
        %v929 = vsub.f32 %v865, %v897
        %v930 = vsub.f32 %v866, %v898
        %v931 = vsub.f32 %v867, %v899
        %v932 = vsub.f32 %v868, %v900
        %v933 = vsub.f32 %v869, %v901
        %v934 = vsub.f32 %v613, %v710
        %v935 = vsub.f32 %v614, %v711
        %v936 = vsub.f32 %v615, %v712
        %v937 = vsub.f32 %v616, %v713
        %v938 = vsub.f32 %v617, %v714
        %v939 = vsub.f32 %v618, %v715
        %v940 = vsub.f32 %v619, %v716
        %v941 = vsub.f32 %v620, %v717
        %v942 = vsub.f32 %v621, %v718
        %v943 = vsub.f32 %v622, %v719
        %v944 = vsub.f32 %v623, %v720
        %v945 = vsub.f32 %v624, %v721
        %v946 = vsub.f32 %v625, %v722
        %v947 = vsub.f32 %v626, %v723
        %v948 = vsub.f32 %v627, %v724
        %v949 = vsub.f32 %v628, %v725
        %v950 = vsub.f32 %v629, %v726
        %v951 = vsub.f32 %v630, %v727
        %v952 = vsub.f32 %v631, %v728
        %v953 = vsub.f32 %v632, %v729
        %v954 = vsub.f32 %v633, %v730
        %v955 = vsub.f32 %v634, %v731
        %v956 = vsub.f32 %v635, %v732
        %v957 = vsub.f32 %v636, %v733
        %v958 = vsub.f32 %v637, %v734
        %v959 = vsub.f32 %v638, %v735
        %v960 = vsub.f32 %v639, %v736
        %v961 = vsub.f32 %v640, %v737
        %v962 = vsub.f32 %v641, %v738
        %v963 = vsub.f32 %v642, %v739
        %v964 = vsub.f32 %v643, %v740
        %v965 = vsub.f32 %v644, %v741
        %v966 = vadd.f32 %v902, 1e-05
        %v967 = vadd.f32 %v903, 1e-05
        %v968 = vadd.f32 %v904, 1e-05
        %v969 = vadd.f32 %v905, 1e-05
        %v970 = vadd.f32 %v906, 1e-05
        %v971 = vadd.f32 %v907, 1e-05
        %v972 = vadd.f32 %v908, 1e-05
        %v973 = vadd.f32 %v909, 1e-05
        %v974 = vadd.f32 %v910, 1e-05
        %v975 = vadd.f32 %v911, 1e-05
        %v976 = vadd.f32 %v912, 1e-05
        %v977 = vadd.f32 %v913, 1e-05
        %v978 = vadd.f32 %v914, 1e-05
        %v979 = vadd.f32 %v915, 1e-05
        %v980 = vadd.f32 %v916, 1e-05
        %v981 = vadd.f32 %v917, 1e-05
        %v982 = vadd.f32 %v918, 1e-05
        %v983 = vadd.f32 %v919, 1e-05
        %v984 = vadd.f32 %v920, 1e-05
        %v985 = vadd.f32 %v921, 1e-05
        %v986 = vadd.f32 %v922, 1e-05
        %v987 = vadd.f32 %v923, 1e-05
        %v988 = vadd.f32 %v924, 1e-05
        %v989 = vadd.f32 %v925, 1e-05
        %v990 = vadd.f32 %v926, 1e-05
        %v991 = vadd.f32 %v927, 1e-05
        %v992 = vadd.f32 %v928, 1e-05
        %v993 = vadd.f32 %v929, 1e-05
        %v994 = vadd.f32 %v930, 1e-05
        %v995 = vadd.f32 %v931, 1e-05
        %v996 = vadd.f32 %v932, 1e-05
        %v997 = vadd.f32 %v933, 1e-05
        %v998 = vrsqrt.pop %v966
        %v999 = vrsqrt.pop %v967
        %v1000 = vrsqrt.pop %v968
        %v1001 = vrsqrt.pop %v969
        %v1002 = vrsqrt.pop %v970
        %v1003 = vrsqrt.pop %v971
        %v1004 = vrsqrt.pop %v972
        %v1005 = vrsqrt.pop %v973
        %v1006 = vrsqrt.pop %v974
        %v1007 = vrsqrt.pop %v975
        %v1008 = vrsqrt.pop %v976
        %v1009 = vrsqrt.pop %v977
        %v1010 = vrsqrt.pop %v978
        %v1011 = vrsqrt.pop %v979
        %v1012 = vrsqrt.pop %v980
        %v1013 = vrsqrt.pop %v981
        %v1014 = vrsqrt.pop %v982
        %v1015 = vrsqrt.pop %v983
        %v1016 = vrsqrt.pop %v984
        %v1017 = vrsqrt.pop %v985
        %v1018 = vrsqrt.pop %v986
        %v1019 = vrsqrt.pop %v987
        %v1020 = vrsqrt.pop %v988
        %v1021 = vrsqrt.pop %v989
        %v1022 = vrsqrt.pop %v990
        %v1023 = vrsqrt.pop %v991
        %v1024 = vrsqrt.pop %v992
        %v1025 = vrsqrt.pop %v993
        %v1026 = vrsqrt.pop %v994
        %v1027 = vrsqrt.pop %v995
        %v1028 = vrsqrt.pop %v996
        %v1029 = vrsqrt.pop %v997
        %v1030 = vmul.f32 %v934, %v998
        %v1031 = vmul.f32 %v935, %v999
        %v1032 = vmul.f32 %v936, %v1000
        %v1033 = vmul.f32 %v937, %v1001
        %v1034 = vmul.f32 %v938, %v1002
        %v1035 = vmul.f32 %v939, %v1003
        %v1036 = vmul.f32 %v940, %v1004
        %v1037 = vmul.f32 %v941, %v1005
        %v1038 = vmul.f32 %v942, %v1006
        %v1039 = vmul.f32 %v943, %v1007
        %v1040 = vmul.f32 %v944, %v1008
        %v1041 = vmul.f32 %v945, %v1009
        %v1042 = vmul.f32 %v946, %v1010
        %v1043 = vmul.f32 %v947, %v1011
        %v1044 = vmul.f32 %v948, %v1012
        %v1045 = vmul.f32 %v949, %v1013
        %v1046 = vmul.f32 %v950, %v1014
        %v1047 = vmul.f32 %v951, %v1015
        %v1048 = vmul.f32 %v952, %v1016
        %v1049 = vmul.f32 %v953, %v1017
        %v1050 = vmul.f32 %v954, %v1018
        %v1051 = vmul.f32 %v955, %v1019
        %v1052 = vmul.f32 %v956, %v1020
        %v1053 = vmul.f32 %v957, %v1021
        %v1054 = vmul.f32 %v958, %v1022
        %v1055 = vmul.f32 %v959, %v1023
        %v1056 = vmul.f32 %v960, %v1024
        %v1057 = vmul.f32 %v961, %v1025
        %v1058 = vmul.f32 %v962, %v1026
        %v1059 = vmul.f32 %v963, %v1027
        %v1060 = vmul.f32 %v964, %v1028
        %v1061 = vmul.f32 %v965, %v1029
        %v1062 = vld [vmem:[%s2] sm:$0x1]
        %v1064 = vlaneseq
        %v1065 = vshrl.u32 %v1064, 7
        %v1066 = vsub.s32 0, %v1065
        %v1067 = vrot.slane %v1062, %v1066
        %v1069 = vmul.f32 %v1030, %v1067
        %v1070 = vmul.f32 %v1031, %v1067
        %v1071 = vmul.f32 %v1032, %v1067
        %v1072 = vmul.f32 %v1033, %v1067
        %v1073 = vmul.f32 %v1034, %v1067
        %v1074 = vmul.f32 %v1035, %v1067
        %v1075 = vmul.f32 %v1036, %v1067
        %v1076 = vmul.f32 %v1037, %v1067
        %v1077 = vmul.f32 %v1038, %v1067
        %v1078 = vmul.f32 %v1039, %v1067
        %v1079 = vmul.f32 %v1040, %v1067
        %v1080 = vmul.f32 %v1041, %v1067
        %v1081 = vmul.f32 %v1042, %v1067
        %v1082 = vmul.f32 %v1043, %v1067
        %v1083 = vmul.f32 %v1044, %v1067
        %v1084 = vmul.f32 %v1045, %v1067
        %v1085 = vmul.f32 %v1046, %v1067
        %v1086 = vmul.f32 %v1047, %v1067
        %v1087 = vmul.f32 %v1048, %v1067
        %v1088 = vmul.f32 %v1049, %v1067
        %v1089 = vmul.f32 %v1050, %v1067
        %v1090 = vmul.f32 %v1051, %v1067
        %v1091 = vmul.f32 %v1052, %v1067
        %v1092 = vmul.f32 %v1053, %v1067
        %v1093 = vmul.f32 %v1054, %v1067
        %v1094 = vmul.f32 %v1055, %v1067
        %v1095 = vmul.f32 %v1056, %v1067
        %v1096 = vmul.f32 %v1057, %v1067
        %v1097 = vmul.f32 %v1058, %v1067
        %v1098 = vmul.f32 %v1059, %v1067
        %v1099 = vmul.f32 %v1060, %v1067
        %v1100 = vmul.f32 %v1061, %v1067
        %v1101 = vld [vmem:[%s3] sm:$0x1]
        %v1103 = vlaneseq
        %v1104 = vshrl.u32 %v1103, 7
        %v1105 = vsub.s32 0, %v1104
        %v1106 = vrot.slane %v1101, %v1105
        %v1108 = vadd.f32 %v1069, %v1106
        %v1109 = vadd.f32 %v1070, %v1106
        %v1110 = vadd.f32 %v1071, %v1106
        %v1111 = vadd.f32 %v1072, %v1106
        %v1112 = vadd.f32 %v1073, %v1106
        %v1113 = vadd.f32 %v1074, %v1106
        %v1114 = vadd.f32 %v1075, %v1106
        %v1115 = vadd.f32 %v1076, %v1106
        %v1116 = vadd.f32 %v1077, %v1106
        %v1117 = vadd.f32 %v1078, %v1106
        %v1118 = vadd.f32 %v1079, %v1106
        %v1119 = vadd.f32 %v1080, %v1106
        %v1120 = vadd.f32 %v1081, %v1106
        %v1121 = vadd.f32 %v1082, %v1106
        %v1122 = vadd.f32 %v1083, %v1106
        %v1123 = vadd.f32 %v1084, %v1106
        %v1124 = vadd.f32 %v1085, %v1106
        %v1125 = vadd.f32 %v1086, %v1106
        %v1126 = vadd.f32 %v1087, %v1106
        %v1127 = vadd.f32 %v1088, %v1106
        %v1128 = vadd.f32 %v1089, %v1106
        %v1129 = vadd.f32 %v1090, %v1106
        %v1130 = vadd.f32 %v1091, %v1106
        %v1131 = vadd.f32 %v1092, %v1106
        %v1132 = vadd.f32 %v1093, %v1106
        %v1133 = vadd.f32 %v1094, %v1106
        %v1134 = vadd.f32 %v1095, %v1106
        %v1135 = vadd.f32 %v1096, %v1106
        %v1136 = vadd.f32 %v1097, %v1106
        %v1137 = vadd.f32 %v1098, %v1106
        %v1138 = vadd.f32 %v1099, %v1106
        %v1139 = vadd.f32 %v1100, %v1106
        %v1140 = vpack.c.bf16 %v1109, %v1108
        %v1141 = vpack.c.bf16 %v1111, %v1110
        %v1142 = vpack.c.bf16 %v1113, %v1112
        %v1143 = vpack.c.bf16 %v1115, %v1114
        %v1144 = vpack.c.bf16 %v1117, %v1116
        %v1145 = vpack.c.bf16 %v1119, %v1118
        %v1146 = vpack.c.bf16 %v1121, %v1120
        %v1147 = vpack.c.bf16 %v1123, %v1122
        %v1148 = vpack.c.bf16 %v1125, %v1124
        %v1149 = vpack.c.bf16 %v1127, %v1126
        %v1150 = vpack.c.bf16 %v1129, %v1128
        %v1151 = vpack.c.bf16 %v1131, %v1130
        %v1152 = vpack.c.bf16 %v1133, %v1132
        %v1153 = vpack.c.bf16 %v1135, %v1134
        %v1154 = vpack.c.bf16 %v1137, %v1136
        %v1155 = vpack.c.bf16 %v1139, %v1138
        %v1156 = vld [vmem:[#allocation6] sm:$0xf]
        %v1157 = vld [vmem:[#allocation6 + $0x4] sm:$0xf]
        %v1158 = vld [vmem:[#allocation6 + $0x8] sm:$0xf]
        %v1159 = vld [vmem:[#allocation6 + $0xc] sm:$0xf]
        %v1160 = vld [vmem:[#allocation6 + $0x10] sm:$0xf]
        %v1161 = vld [vmem:[#allocation6 + $0x14] sm:$0xf]
        %v1162 = vld [vmem:[#allocation6 + $0x18] sm:$0xf]
        %v1163 = vld [vmem:[#allocation6 + $0x1c] sm:$0xf]
        %v1164 = vld [vmem:[#allocation6 + $0x20] sm:$0xf]
        %v1165 = vld [vmem:[#allocation6 + $0x24] sm:$0xf]
        %v1166 = vld [vmem:[#allocation6 + $0x28] sm:$0xf]
        %v1167 = vld [vmem:[#allocation6 + $0x2c] sm:$0xf]
        %v1168 = vld [vmem:[#allocation6 + $0x30] sm:$0xf]
        %v1169 = vld [vmem:[#allocation6 + $0x34] sm:$0xf]
        %v1170 = vld [vmem:[#allocation6 + $0x38] sm:$0xf]
        %v1171 = vld [vmem:[#allocation6 + $0x3c] sm:$0xf]
        %v1172 = vld [vmem:[%s5] sm:$0x1]
        %v1174 = vlaneseq
        %v1175 = vshrl.u32 %v1174, 7
        %v1176 = vsub.s32 0, %v1175
        %v1177 = vrot.slane %v1172, %v1176
        %v1195 = vunpack.c.l.b16 %v1156
        %v1196 = vunpack.c.l.b16 %v1157
        %v1197 = vunpack.c.l.b16 %v1158
        %v1198 = vunpack.c.l.b16 %v1159
        %v1199 = vunpack.c.l.b16 %v1160
        %v1200 = vunpack.c.l.b16 %v1161
        %v1201 = vunpack.c.l.b16 %v1162
        %v1202 = vunpack.c.l.b16 %v1163
        %v1203 = vunpack.c.l.b16 %v1164
        %v1204 = vunpack.c.l.b16 %v1165
        %v1205 = vunpack.c.l.b16 %v1166
        %v1206 = vunpack.c.l.b16 %v1167
        %v1207 = vunpack.c.l.b16 %v1168
        %v1208 = vunpack.c.l.b16 %v1169
        %v1209 = vunpack.c.l.b16 %v1170
        %v1210 = vunpack.c.l.b16 %v1171
        %v1211 = vpack.c.b16 %v1196, %v1195
        %v1212 = vpack.c.b16 %v1198, %v1197
        %v1213 = vpack.c.b16 %v1200, %v1199
        %v1214 = vpack.c.b16 %v1202, %v1201
        %v1215 = vpack.c.b16 %v1204, %v1203
        %v1216 = vpack.c.b16 %v1206, %v1205
        %v1217 = vpack.c.b16 %v1208, %v1207
        %v1218 = vpack.c.b16 %v1210, %v1209
        %1227 = vmatprep.subr.bf16.mxu0 0
        %1228 = vmatpush1.bf16.msra.mxu0 %v1211
        %1229 = vmatprep.subr.bf16.mxu0 0
        %1230 = vmatpush1.bf16.msra.mxu0 %v1212
        %1231 = vmatprep.subr.bf16.mxu0 0
        %1232 = vmatpush1.bf16.msra.mxu0 %v1213
        %1233 = vmatprep.subr.bf16.mxu0 0
        %1234 = vmatpush1.bf16.msra.mxu0 %v1214
        %1235 = vmatprep.subr.bf16.mxu0 0
        %1236 = vmatpush1.bf16.msra.mxu0 %v1215
        %1237 = vmatprep.subr.bf16.mxu0 0
        %1238 = vmatpush1.bf16.msra.mxu0 %v1216
        %1239 = vmatprep.subr.bf16.mxu0 0
        %1240 = vmatpush1.bf16.msra.mxu0 %v1217
        %1241 = vmatprep.subr.bf16.mxu0 0
        %1242 = vmatpush1.bf16.msra.mxu0 %v1218
        %1243 = vmatprep.subr.bf16.mxu0 0
        %1244 = vmatpush1.bf16.msra.mxu0 0
        %1245 = vmatprep.subr.bf16.mxu0 0
        %1246 = vmatpush1.bf16.msra.mxu0 0
        %1247 = vmatprep.subr.bf16.mxu0 0
        %1248 = vmatpush1.bf16.msra.mxu0 0
        %1249 = vmatprep.subr.bf16.mxu0 0
        %1250 = vmatpush1.bf16.msra.mxu0 0
        %1251 = vmatprep.subr.bf16.mxu0 0
        %1252 = vmatpush1.bf16.msra.mxu0 0
        %1253 = vmatprep.subr.bf16.mxu0 0
        %1254 = vmatpush1.bf16.msra.mxu0 0
        %1255 = vmatprep.subr.bf16.mxu0 0
        %1256 = vmatpush1.bf16.msra.mxu0 0
        %1257 = vmatprep.subr.bf16.mxu0 0
        %1258 = vmatpush1.bf16.msra.mxu0 0
        %1259 = vmatprep.mubr.bf16.mxu0 0
        %1260 = vmatmul.mubr.bf16.gmra.mrb[0].mxu0 %v1140
        %v1261 = vpop.f32.mrb[0].mxu0
        %v1262 = vadd.f32 %v1177, %v1261
        %v1263 = vpop.f32.mrb[0].mxu0
        %v1264 = vpop.f32.mrb[0].mxu0
        %v1265 = vadd.f32 %v1177, %v1264
        %v1266 = vpop.f32.mrb[0].mxu0
        %1267 = vmatprep.mubr.bf16.mxu0 0
        %1268 = vmatmul.mubr.bf16.gmra.mrb[0].mxu0 %v1141
        %v1269 = vpop.f32.mrb[0].mxu0
        %v1270 = vadd.f32 %v1177, %v1269
        %v1271 = vpop.f32.mrb[0].mxu0
        %v1272 = vpop.f32.mrb[0].mxu0
        %v1273 = vadd.f32 %v1177, %v1272
        %v1274 = vpop.f32.mrb[0].mxu0
        %1275 = vmatprep.mubr.bf16.mxu0 0
        %1276 = vmatmul.mubr.bf16.gmra.mrb[0].mxu0 %v1142
        %v1277 = vpop.f32.mrb[0].mxu0
        %v1278 = vadd.f32 %v1177, %v1277
        %v1279 = vpop.f32.mrb[0].mxu0
        %v1280 = vpop.f32.mrb[0].mxu0
        %v1281 = vadd.f32 %v1177, %v1280
        %v1282 = vpop.f32.mrb[0].mxu0
        %1283 = vmatprep.mubr.bf16.mxu0 0
        %1284 = vmatmul.mubr.bf16.gmra.mrb[0].mxu0 %v1143
        %v1285 = vpop.f32.mrb[0].mxu0
        %v1286 = vadd.f32 %v1177, %v1285
        %v1287 = vpop.f32.mrb[0].mxu0
        %v1288 = vpop.f32.mrb[0].mxu0
        %v1289 = vadd.f32 %v1177, %v1288
        %v1290 = vpop.f32.mrb[0].mxu0
        %1291 = vmatprep.mubr.bf16.mxu0 0
        %1292 = vmatmul.mubr.bf16.gmra.mrb[0].mxu0 %v1144
        %v1293 = vpop.f32.mrb[0].mxu0
        %v1294 = vadd.f32 %v1177, %v1293
        %v1295 = vpop.f32.mrb[0].mxu0
        %v1296 = vpop.f32.mrb[0].mxu0
        %v1297 = vadd.f32 %v1177, %v1296
        %v1298 = vpop.f32.mrb[0].mxu0
        %1299 = vmatprep.mubr.bf16.mxu0 0
        %1300 = vmatmul.mubr.bf16.gmra.mrb[0].mxu0 %v1145
        %v1301 = vpop.f32.mrb[0].mxu0
        %v1302 = vadd.f32 %v1177, %v1301
        %v1303 = vpop.f32.mrb[0].mxu0
        %v1304 = vpop.f32.mrb[0].mxu0
        %v1305 = vadd.f32 %v1177, %v1304
        %v1306 = vpop.f32.mrb[0].mxu0
        %1307 = vmatprep.mubr.bf16.mxu0 0
        %1308 = vmatmul.mubr.bf16.gmra.mrb[0].mxu0 %v1146
        %v1309 = vpop.f32.mrb[0].mxu0
        %v1310 = vadd.f32 %v1177, %v1309
        %v1311 = vpop.f32.mrb[0].mxu0
        %v1312 = vpop.f32.mrb[0].mxu0
        %v1313 = vadd.f32 %v1177, %v1312
        %v1314 = vpop.f32.mrb[0].mxu0
        %1315 = vmatprep.mubr.bf16.mxu0 0
        %1316 = vmatmul.mubr.bf16.gmra.mrb[0].mxu0 %v1147
        %v1317 = vpop.f32.mrb[0].mxu0
        %v1318 = vadd.f32 %v1177, %v1317
        %v1319 = vpop.f32.mrb[0].mxu0
        %v1320 = vpop.f32.mrb[0].mxu0
        %v1321 = vadd.f32 %v1177, %v1320
        %v1322 = vpop.f32.mrb[0].mxu0
        %1323 = vmatprep.mubr.bf16.mxu0 0
        %1324 = vmatmul.mubr.bf16.gmra.mrb[0].mxu0 %v1148
        %v1325 = vpop.f32.mrb[0].mxu0
        %v1326 = vadd.f32 %v1177, %v1325
        %v1327 = vpop.f32.mrb[0].mxu0
        %v1328 = vpop.f32.mrb[0].mxu0
        %v1329 = vadd.f32 %v1177, %v1328
        %v1330 = vpop.f32.mrb[0].mxu0
        %1331 = vmatprep.mubr.bf16.mxu0 0
        %1332 = vmatmul.mubr.bf16.gmra.mrb[0].mxu0 %v1149
        %v1333 = vpop.f32.mrb[0].mxu0
        %v1334 = vadd.f32 %v1177, %v1333
        %v1335 = vpop.f32.mrb[0].mxu0
        %v1336 = vpop.f32.mrb[0].mxu0
        %v1337 = vadd.f32 %v1177, %v1336
        %v1338 = vpop.f32.mrb[0].mxu0
        %1339 = vmatprep.mubr.bf16.mxu0 0
        %1340 = vmatmul.mubr.bf16.gmra.mrb[0].mxu0 %v1150
        %v1341 = vpop.f32.mrb[0].mxu0
        %v1342 = vadd.f32 %v1177, %v1341
        %v1343 = vpop.f32.mrb[0].mxu0
        %v1344 = vpop.f32.mrb[0].mxu0
        %v1345 = vadd.f32 %v1177, %v1344
        %v1346 = vpop.f32.mrb[0].mxu0
        %1347 = vmatprep.mubr.bf16.mxu0 0
        %1348 = vmatmul.mubr.bf16.gmra.mrb[0].mxu0 %v1151
        %v1349 = vpop.f32.mrb[0].mxu0
        %v1350 = vadd.f32 %v1177, %v1349
        %v1351 = vpop.f32.mrb[0].mxu0
        %v1352 = vpop.f32.mrb[0].mxu0
        %v1353 = vadd.f32 %v1177, %v1352
        %v1354 = vpop.f32.mrb[0].mxu0
        %1355 = vmatprep.mubr.bf16.mxu0 0
        %1356 = vmatmul.mubr.bf16.gmra.mrb[0].mxu0 %v1152
        %v1357 = vpop.f32.mrb[0].mxu0
        %v1358 = vadd.f32 %v1177, %v1357
        %v1359 = vpop.f32.mrb[0].mxu0
        %v1360 = vpop.f32.mrb[0].mxu0
        %v1361 = vadd.f32 %v1177, %v1360
        %v1362 = vpop.f32.mrb[0].mxu0
        %1363 = vmatprep.mubr.bf16.mxu0 0
        %1364 = vmatmul.mubr.bf16.gmra.mrb[0].mxu0 %v1153
        %v1365 = vpop.f32.mrb[0].mxu0
        %v1366 = vadd.f32 %v1177, %v1365
        %v1367 = vpop.f32.mrb[0].mxu0
        %v1368 = vpop.f32.mrb[0].mxu0
        %v1369 = vadd.f32 %v1177, %v1368
        %v1370 = vpop.f32.mrb[0].mxu0
        %1371 = vmatprep.mubr.bf16.mxu0 0
        %1372 = vmatmul.mubr.bf16.gmra.mrb[0].mxu0 %v1154
        %v1373 = vpop.f32.mrb[0].mxu0
        %v1374 = vadd.f32 %v1177, %v1373
        %v1375 = vpop.f32.mrb[0].mxu0
        %v1376 = vpop.f32.mrb[0].mxu0
        %v1377 = vadd.f32 %v1177, %v1376
        %v1378 = vpop.f32.mrb[0].mxu0
        %1379 = vmatprep.mubr.bf16.mxu0 0
        %1380 = vmatmul.mubr.bf16.gmra.mrb[0].mxu0 %v1155
        %v1381 = vpop.f32.mrb[0].mxu0
        %v1382 = vadd.f32 %v1177, %v1381
        %v1383 = vpop.f32.mrb[0].mxu0
        %v1384 = vpop.f32.mrb[0].mxu0
        %v1385 = vadd.f32 %v1177, %v1384
        %v1386 = vpop.f32.mrb[0].mxu0
        %1387 = vdwg.mxu0
        %v1388 = vpack.c.bf16 %v1265, %v1262
        %v1389 = vpack.c.bf16 %v1273, %v1270
        %v1390 = vpack.c.bf16 %v1281, %v1278
        %v1391 = vpack.c.bf16 %v1289, %v1286
        %v1392 = vpack.c.bf16 %v1297, %v1294
        %v1393 = vpack.c.bf16 %v1305, %v1302
        %v1394 = vpack.c.bf16 %v1313, %v1310
        %v1395 = vpack.c.bf16 %v1321, %v1318
        %v1396 = vpack.c.bf16 %v1329, %v1326
        %v1397 = vpack.c.bf16 %v1337, %v1334
        %v1398 = vpack.c.bf16 %v1345, %v1342
        %v1399 = vpack.c.bf16 %v1353, %v1350
        %v1400 = vpack.c.bf16 %v1361, %v1358
        %v1401 = vpack.c.bf16 %v1369, %v1366
        %v1402 = vpack.c.bf16 %v1377, %v1374
        %v1403 = vpack.c.bf16 %v1385, %v1382
        %v1404 = vmul.bf16 %v1388, 1056980736
        %v1405 = vmul.bf16 %v1389, 1056980736
        %v1406 = vmul.bf16 %v1390, 1056980736
        %v1407 = vmul.bf16 %v1391, 1056980736
        %v1408 = vmul.bf16 %v1392, 1056980736
        %v1409 = vmul.bf16 %v1393, 1056980736
        %v1410 = vmul.bf16 %v1394, 1056980736
        %v1411 = vmul.bf16 %v1395, 1056980736
        %v1412 = vmul.bf16 %v1396, 1056980736
        %v1413 = vmul.bf16 %v1397, 1056980736
        %v1414 = vmul.bf16 %v1398, 1056980736
        %v1415 = vmul.bf16 %v1399, 1056980736
        %v1416 = vmul.bf16 %v1400, 1056980736
        %v1417 = vmul.bf16 %v1401, 1056980736
        %v1418 = vmul.bf16 %v1402, 1056980736
        %v1419 = vmul.bf16 %v1403, 1056980736
        %v1420 = vmul.bf16 %v1388, 1027030327
        %v1421 = vmul.bf16 %v1389, 1027030327
        %v1422 = vmul.bf16 %v1390, 1027030327
        %v1423 = vmul.bf16 %v1391, 1027030327
        %v1424 = vmul.bf16 %v1392, 1027030327
        %v1425 = vmul.bf16 %v1393, 1027030327
        %v1426 = vmul.bf16 %v1394, 1027030327
        %v1427 = vmul.bf16 %v1395, 1027030327
        %v1428 = vmul.bf16 %v1396, 1027030327
        %v1429 = vmul.bf16 %v1397, 1027030327
        %v1430 = vmul.bf16 %v1398, 1027030327
        %v1431 = vmul.bf16 %v1399, 1027030327
        %v1432 = vmul.bf16 %v1400, 1027030327
        %v1433 = vmul.bf16 %v1401, 1027030327
        %v1434 = vmul.bf16 %v1402, 1027030327
        %v1435 = vmul.bf16 %v1403, 1027030327
        %v1436 = vmul.bf16 %v1420, %v1388
        %v1437 = vmul.bf16 %v1421, %v1389
        %v1438 = vmul.bf16 %v1422, %v1390
        %v1439 = vmul.bf16 %v1423, %v1391
        %v1440 = vmul.bf16 %v1424, %v1392
        %v1441 = vmul.bf16 %v1425, %v1393
        %v1442 = vmul.bf16 %v1426, %v1394
        %v1443 = vmul.bf16 %v1427, %v1395
        %v1444 = vmul.bf16 %v1428, %v1396
        %v1445 = vmul.bf16 %v1429, %v1397
        %v1446 = vmul.bf16 %v1430, %v1398
        %v1447 = vmul.bf16 %v1431, %v1399
        %v1448 = vmul.bf16 %v1432, %v1400
        %v1449 = vmul.bf16 %v1433, %v1401
        %v1450 = vmul.bf16 %v1434, %v1402
        %v1451 = vmul.bf16 %v1435, %v1403
        %v1452 = vmul.bf16 %v1436, %v1388
        %v1453 = vmul.bf16 %v1437, %v1389
        %v1454 = vmul.bf16 %v1438, %v1390
        %v1455 = vmul.bf16 %v1439, %v1391
        %v1456 = vmul.bf16 %v1440, %v1392
        %v1457 = vmul.bf16 %v1441, %v1393
        %v1458 = vmul.bf16 %v1442, %v1394
        %v1459 = vmul.bf16 %v1443, %v1395
        %v1460 = vmul.bf16 %v1444, %v1396
        %v1461 = vmul.bf16 %v1445, %v1397
        %v1462 = vmul.bf16 %v1446, %v1398
        %v1463 = vmul.bf16 %v1447, %v1399
        %v1464 = vmul.bf16 %v1448, %v1400
        %v1465 = vmul.bf16 %v1449, %v1401
        %v1466 = vmul.bf16 %v1450, %v1402
        %v1467 = vmul.bf16 %v1451, %v1403
        %v1468 = vadd.bf16 %v1388, %v1452
        %v1469 = vadd.bf16 %v1389, %v1453
        %v1470 = vadd.bf16 %v1390, %v1454
        %v1471 = vadd.bf16 %v1391, %v1455
        %v1472 = vadd.bf16 %v1392, %v1456
        %v1473 = vadd.bf16 %v1393, %v1457
        %v1474 = vadd.bf16 %v1394, %v1458
        %v1475 = vadd.bf16 %v1395, %v1459
        %v1476 = vadd.bf16 %v1396, %v1460
        %v1477 = vadd.bf16 %v1397, %v1461
        %v1478 = vadd.bf16 %v1398, %v1462
        %v1479 = vadd.bf16 %v1399, %v1463
        %v1480 = vadd.bf16 %v1400, %v1464
        %v1481 = vadd.bf16 %v1401, %v1465
        %v1482 = vadd.bf16 %v1402, %v1466
        %v1483 = vadd.bf16 %v1403, %v1467
        %v1484 = vmul.bf16 %v1468, 1061961548
        %v1485 = vmul.bf16 %v1469, 1061961548
        %v1486 = vmul.bf16 %v1470, 1061961548
        %v1487 = vmul.bf16 %v1471, 1061961548
        %v1488 = vmul.bf16 %v1472, 1061961548
        %v1489 = vmul.bf16 %v1473, 1061961548
        %v1490 = vmul.bf16 %v1474, 1061961548
        %v1491 = vmul.bf16 %v1475, 1061961548
        %v1492 = vmul.bf16 %v1476, 1061961548
        %v1493 = vmul.bf16 %v1477, 1061961548
        %v1494 = vmul.bf16 %v1478, 1061961548
        %v1495 = vmul.bf16 %v1479, 1061961548
        %v1496 = vmul.bf16 %v1480, 1061961548
        %v1497 = vmul.bf16 %v1481, 1061961548
        %v1498 = vmul.bf16 %v1482, 1061961548
        %v1499 = vmul.bf16 %v1483, 1061961548
        %v1500 = vtanh.bf16.pop %v1484
        %v1501 = vtanh.bf16.pop %v1485
        %v1502 = vtanh.bf16.pop %v1486
        %v1503 = vtanh.bf16.pop %v1487
        %v1504 = vtanh.bf16.pop %v1488
        %v1505 = vtanh.bf16.pop %v1489
        %v1506 = vtanh.bf16.pop %v1490
        %v1507 = vtanh.bf16.pop %v1491
        %v1508 = vtanh.bf16.pop %v1492
        %v1509 = vtanh.bf16.pop %v1493
        %v1510 = vtanh.bf16.pop %v1494
        %v1511 = vtanh.bf16.pop %v1495
        %v1512 = vtanh.bf16.pop %v1496
        %v1513 = vtanh.bf16.pop %v1497
        %v1514 = vtanh.bf16.pop %v1498
        %v1515 = vtanh.bf16.pop %v1499
        %v1516 = vadd.bf16 %v1500, 1065369472
        %v1517 = vadd.bf16 %v1501, 1065369472
        %v1518 = vadd.bf16 %v1502, 1065369472
        %v1519 = vadd.bf16 %v1503, 1065369472
        %v1520 = vadd.bf16 %v1504, 1065369472
        %v1521 = vadd.bf16 %v1505, 1065369472
        %v1522 = vadd.bf16 %v1506, 1065369472
        %v1523 = vadd.bf16 %v1507, 1065369472
        %v1524 = vadd.bf16 %v1508, 1065369472
        %v1525 = vadd.bf16 %v1509, 1065369472
        %v1526 = vadd.bf16 %v1510, 1065369472
        %v1527 = vadd.bf16 %v1511, 1065369472
        %v1528 = vadd.bf16 %v1512, 1065369472
        %v1529 = vadd.bf16 %v1513, 1065369472
        %v1530 = vadd.bf16 %v1514, 1065369472
        %v1531 = vadd.bf16 %v1515, 1065369472
        %v1532 = vmul.bf16 %v1404, %v1516
        %v1533 = vmul.bf16 %v1405, %v1517
        %v1534 = vmul.bf16 %v1406, %v1518
        %v1535 = vmul.bf16 %v1407, %v1519
        %v1536 = vmul.bf16 %v1408, %v1520
        %v1537 = vmul.bf16 %v1409, %v1521
        %v1538 = vmul.bf16 %v1410, %v1522
        %v1539 = vmul.bf16 %v1411, %v1523
        %v1540 = vmul.bf16 %v1412, %v1524
        %v1541 = vmul.bf16 %v1413, %v1525
        %v1542 = vmul.bf16 %v1414, %v1526
        %v1543 = vmul.bf16 %v1415, %v1527
        %v1544 = vmul.bf16 %v1416, %v1528
        %v1545 = vmul.bf16 %v1417, %v1529
        %v1546 = vmul.bf16 %v1418, %v1530
        %v1547 = vmul.bf16 %v1419, %v1531
        %v1564 = vunpack.c.l.b16 %v1532
        %v1565 = vunpack.c.h.b16 %v1532
        %v1566 = vunpack.c.l.b16 %v1533
        %v1567 = vunpack.c.h.b16 %v1533
        %v1568 = vunpack.c.l.b16 %v1534
        %v1569 = vunpack.c.h.b16 %v1534
        %v1570 = vunpack.c.l.b16 %v1535
        %v1571 = vunpack.c.h.b16 %v1535
        %v1572 = vunpack.c.l.b16 %v1536
        %v1573 = vunpack.c.h.b16 %v1536
        %v1574 = vunpack.c.l.b16 %v1537
        %v1575 = vunpack.c.h.b16 %v1537
        %v1576 = vunpack.c.l.b16 %v1538
        %v1577 = vunpack.c.h.b16 %v1538
        %v1578 = vunpack.c.l.b16 %v1539
        %v1579 = vunpack.c.h.b16 %v1539
        %v1580 = vunpack.c.l.b16 %v1540
        %v1581 = vunpack.c.h.b16 %v1540
        %v1582 = vunpack.c.l.b16 %v1541
        %v1583 = vunpack.c.h.b16 %v1541
        %v1584 = vunpack.c.l.b16 %v1542
        %v1585 = vunpack.c.h.b16 %v1542
        %v1586 = vunpack.c.l.b16 %v1543
        %v1587 = vunpack.c.h.b16 %v1543
        %v1588 = vunpack.c.l.b16 %v1544
        %v1589 = vunpack.c.h.b16 %v1544
        %v1590 = vunpack.c.l.b16 %v1545
        %v1591 = vunpack.c.h.b16 %v1545
        %v1592 = vunpack.c.l.b16 %v1546
        %v1593 = vunpack.c.h.b16 %v1546
        %v1594 = vunpack.c.l.b16 %v1547
        %v1595 = vunpack.c.h.b16 %v1547
        %v1596 = vpack.c.b16 %v1564, %v1564
        %v1597 = vpack.c.b16 %v1565, %v1565
        %v1598 = vpack.c.b16 %v1566, %v1566
        %v1599 = vpack.c.b16 %v1567, %v1567
        %v1600 = vpack.c.b16 %v1568, %v1568
        %v1601 = vpack.c.b16 %v1569, %v1569
        %v1602 = vpack.c.b16 %v1570, %v1570
        %v1603 = vpack.c.b16 %v1571, %v1571
        %v1604 = vpack.c.b16 %v1572, %v1572
        %v1605 = vpack.c.b16 %v1573, %v1573
        %v1606 = vpack.c.b16 %v1574, %v1574
        %v1607 = vpack.c.b16 %v1575, %v1575
        %v1608 = vpack.c.b16 %v1576, %v1576
        %v1609 = vpack.c.b16 %v1577, %v1577
        %v1610 = vpack.c.b16 %v1578, %v1578
        %v1611 = vpack.c.b16 %v1579, %v1579
        %v1612 = vpack.c.b16 %v1580, %v1580
        %v1613 = vpack.c.b16 %v1581, %v1581
        %v1614 = vpack.c.b16 %v1582, %v1582
        %v1615 = vpack.c.b16 %v1583, %v1583
        %v1616 = vpack.c.b16 %v1584, %v1584
        %v1617 = vpack.c.b16 %v1585, %v1585
        %v1618 = vpack.c.b16 %v1586, %v1586
        %v1619 = vpack.c.b16 %v1587, %v1587
        %v1620 = vpack.c.b16 %v1588, %v1588
        %v1621 = vpack.c.b16 %v1589, %v1589
        %v1622 = vpack.c.b16 %v1590, %v1590
        %v1623 = vpack.c.b16 %v1591, %v1591
        %v1624 = vpack.c.b16 %v1592, %v1592
        %v1625 = vpack.c.b16 %v1593, %v1593
        %v1626 = vpack.c.b16 %v1594, %v1594
        %v1627 = vpack.c.b16 %v1595, %v1595
        %1660 = vst [vmem:[%s529] sm:$0xf] %v1596
        %1661 = vst [vmem:[%s529 + $0x4] sm:$0xf] %v1597
        %1662 = vst [vmem:[%s529 + $0x8] sm:$0xf] %v1598
        %1663 = vst [vmem:[%s529 + $0xc] sm:$0xf] %v1599
        %1664 = vst [vmem:[%s529 + $0x10] sm:$0xf] %v1600
        %1665 = vst [vmem:[%s529 + $0x14] sm:$0xf] %v1601
        %1666 = vst [vmem:[%s529 + $0x18] sm:$0xf] %v1602
        %1667 = vst [vmem:[%s529 + $0x1c] sm:$0xf] %v1603
        %1668 = vst [vmem:[%s529 + $0x20] sm:$0xf] %v1604
        %1669 = vst [vmem:[%s529 + $0x24] sm:$0xf] %v1605
        %1670 = vst [vmem:[%s529 + $0x28] sm:$0xf] %v1606
        %1671 = vst [vmem:[%s529 + $0x2c] sm:$0xf] %v1607
        %1672 = vst [vmem:[%s529 + $0x30] sm:$0xf] %v1608
        %1673 = vst [vmem:[%s529 + $0x34] sm:$0xf] %v1609
        %1674 = vst [vmem:[%s529 + $0x38] sm:$0xf] %v1610
        %1675 = vst [vmem:[%s529 + $0x3c] sm:$0xf] %v1611
        %1676 = vst [vmem:[%s529 + $0x40] sm:$0xf] %v1612
        %1677 = vst [vmem:[%s529 + $0x44] sm:$0xf] %v1613
        %1678 = vst [vmem:[%s529 + $0x48] sm:$0xf] %v1614
        %1679 = vst [vmem:[%s529 + $0x4c] sm:$0xf] %v1615
        %1680 = vst [vmem:[%s529 + $0x50] sm:$0xf] %v1616
        %1681 = vst [vmem:[%s529 + $0x54] sm:$0xf] %v1617
        %1682 = vst [vmem:[%s529 + $0x58] sm:$0xf] %v1618
        %1683 = vst [vmem:[%s529 + $0x5c] sm:$0xf] %v1619
        %1684 = vst [vmem:[%s529 + $0x60] sm:$0xf] %v1620
        %1685 = vst [vmem:[%s529 + $0x64] sm:$0xf] %v1621
        %1686 = vst [vmem:[%s529 + $0x68] sm:$0xf] %v1622
        %1687 = vst [vmem:[%s529 + $0x6c] sm:$0xf] %v1623
        %1688 = vst [vmem:[%s529 + $0x70] sm:$0xf] %v1624
        %1689 = vst [vmem:[%s529 + $0x74] sm:$0xf] %v1625
        %1690 = vst [vmem:[%s529 + $0x78] sm:$0xf] %v1626
        %1691 = vst [vmem:[%s529 + $0x7c] sm:$0xf] %v1627
        %v1692 = vld [vmem:[#allocation8] sm:$0xf]
        %v1693 = vld [vmem:[#allocation8 + $0x4] sm:$0xf]
        %v1694 = vld [vmem:[#allocation8 + $0x8] sm:$0xf]
        %v1695 = vld [vmem:[#allocation8 + $0xc] sm:$0xf]
        %v1696 = vld [vmem:[#allocation8 + $0x10] sm:$0xf]
        %v1697 = vld [vmem:[#allocation8 + $0x14] sm:$0xf]
        %v1698 = vld [vmem:[#allocation8 + $0x18] sm:$0xf]
        %v1699 = vld [vmem:[#allocation8 + $0x1c] sm:$0xf]
        %v1700 = vld [vmem:[#allocation8 + $0x20] sm:$0xf]
        %v1701 = vld [vmem:[#allocation8 + $0x24] sm:$0xf]
        %v1702 = vld [vmem:[#allocation8 + $0x28] sm:$0xf]
        %v1703 = vld [vmem:[#allocation8 + $0x2c] sm:$0xf]
        %v1704 = vld [vmem:[#allocation8 + $0x30] sm:$0xf]
        %v1705 = vld [vmem:[#allocation8 + $0x34] sm:$0xf]
        %v1706 = vld [vmem:[#allocation8 + $0x38] sm:$0xf]
        %v1707 = vld [vmem:[#allocation8 + $0x3c] sm:$0xf]
        %v1708 = vld [vmem:[%s7] sm:$0x1]
        %v1710 = vlaneseq
        %v1711 = vshrl.u32 %v1710, 7
        %v1712 = vsub.s32 0, %v1711
        %v1713 = vrot.slane %v1708, %v1712
        %v1731 = vunpack.c.l.b16 %v1692
        %v1732 = vunpack.c.l.b16 %v1693
        %v1733 = vunpack.c.l.b16 %v1694
        %v1734 = vunpack.c.l.b16 %v1695
        %v1735 = vunpack.c.l.b16 %v1696
        %v1736 = vunpack.c.l.b16 %v1697
        %v1737 = vunpack.c.l.b16 %v1698
        %v1738 = vunpack.c.l.b16 %v1699
        %v1739 = vunpack.c.l.b16 %v1700
        %v1740 = vunpack.c.l.b16 %v1701
        %v1741 = vunpack.c.l.b16 %v1702
        %v1742 = vunpack.c.l.b16 %v1703
        %v1743 = vunpack.c.l.b16 %v1704
        %v1744 = vunpack.c.l.b16 %v1705
        %v1745 = vunpack.c.l.b16 %v1706
        %v1746 = vunpack.c.l.b16 %v1707
        %v1747 = vpack.c.b16 %v1732, %v1731
        %v1748 = vpack.c.b16 %v1734, %v1733
        %v1749 = vpack.c.b16 %v1736, %v1735
        %v1750 = vpack.c.b16 %v1738, %v1737
        %v1751 = vpack.c.b16 %v1740, %v1739
        %v1752 = vpack.c.b16 %v1742, %v1741
        %v1753 = vpack.c.b16 %v1744, %v1743
        %v1754 = vpack.c.b16 %v1746, %v1745
        %1763 = vmatprep.subr.bf16.mxu0 0
        %1764 = vmatpush1.bf16.msra.mxu0 %v1747
        %1765 = vmatprep.subr.bf16.mxu0 0
        %1766 = vmatpush1.bf16.msra.mxu0 %v1748
        %1767 = vmatprep.subr.bf16.mxu0 0
        %1768 = vmatpush1.bf16.msra.mxu0 %v1749
        %1769 = vmatprep.subr.bf16.mxu0 0
        %1770 = vmatpush1.bf16.msra.mxu0 %v1750
        %1771 = vmatprep.subr.bf16.mxu0 0
        %1772 = vmatpush1.bf16.msra.mxu0 %v1751
        %1773 = vmatprep.subr.bf16.mxu0 0
        %1774 = vmatpush1.bf16.msra.mxu0 %v1752
        %1775 = vmatprep.subr.bf16.mxu0 0
        %1776 = vmatpush1.bf16.msra.mxu0 %v1753
        %1777 = vmatprep.subr.bf16.mxu0 0
        %1778 = vmatpush1.bf16.msra.mxu0 %v1754
        %1779 = vmatprep.subr.bf16.mxu0 0
        %1780 = vmatpush1.bf16.msra.mxu0 0
        %1781 = vmatprep.subr.bf16.mxu0 0
        %1782 = vmatpush1.bf16.msra.mxu0 0
        %1783 = vmatprep.subr.bf16.mxu0 0
        %1784 = vmatpush1.bf16.msra.mxu0 0
        %1785 = vmatprep.subr.bf16.mxu0 0
        %1786 = vmatpush1.bf16.msra.mxu0 0
        %1787 = vmatprep.subr.bf16.mxu0 0
        %1788 = vmatpush1.bf16.msra.mxu0 0
        %1789 = vmatprep.subr.bf16.mxu0 0
        %1790 = vmatpush1.bf16.msra.mxu0 0
        %1791 = vmatprep.subr.bf16.mxu0 0
        %1792 = vmatpush1.bf16.msra.mxu0 0
        %1793 = vmatprep.subr.bf16.mxu0 0
        %1794 = vmatpush1.bf16.msra.mxu0 0
        %1795 = vmatprep.mubr.bf16.mxu0 0
        %1796 = vmatmul.mubr.bf16.gmra.mrb[0].mxu0 %v1532
        %v1797 = vpop.f32.mrb[0].mxu0
        %v1798 = vadd.f32 %v1713, %v1797
        %v1799 = vpop.f32.mrb[0].mxu0
        %v1800 = vpop.f32.mrb[0].mxu0
        %v1801 = vadd.f32 %v1713, %v1800
        %v1802 = vpop.f32.mrb[0].mxu0
        %1803 = vmatprep.mubr.bf16.mxu0 0
        %1804 = vmatmul.mubr.bf16.gmra.mrb[0].mxu0 %v1533
        %v1805 = vpop.f32.mrb[0].mxu0
        %v1806 = vadd.f32 %v1713, %v1805
        %v1807 = vpop.f32.mrb[0].mxu0
        %v1808 = vpop.f32.mrb[0].mxu0
        %v1809 = vadd.f32 %v1713, %v1808
        %v1810 = vpop.f32.mrb[0].mxu0
        %1811 = vmatprep.mubr.bf16.mxu0 0
        %1812 = vmatmul.mubr.bf16.gmra.mrb[0].mxu0 %v1534
        %v1813 = vpop.f32.mrb[0].mxu0
        %v1814 = vadd.f32 %v1713, %v1813
        %v1815 = vpop.f32.mrb[0].mxu0
        %v1816 = vpop.f32.mrb[0].mxu0
        %v1817 = vadd.f32 %v1713, %v1816
        %v1818 = vpop.f32.mrb[0].mxu0
        %1819 = vmatprep.mubr.bf16.mxu0 0
        %1820 = vmatmul.mubr.bf16.gmra.mrb[0].mxu0 %v1535
        %v1821 = vpop.f32.mrb[0].mxu0
        %v1822 = vadd.f32 %v1713, %v1821
        %v1823 = vpop.f32.mrb[0].mxu0
        %v1824 = vpop.f32.mrb[0].mxu0
        %v1825 = vadd.f32 %v1713, %v1824
        %v1826 = vpop.f32.mrb[0].mxu0
        %1827 = vmatprep.mubr.bf16.mxu0 0
        %1828 = vmatmul.mubr.bf16.gmra.mrb[0].mxu0 %v1536
        %v1829 = vpop.f32.mrb[0].mxu0
        %v1830 = vadd.f32 %v1713, %v1829
        %v1831 = vpop.f32.mrb[0].mxu0
        %v1832 = vpop.f32.mrb[0].mxu0
        %v1833 = vadd.f32 %v1713, %v1832
        %v1834 = vpop.f32.mrb[0].mxu0
        %1835 = vmatprep.mubr.bf16.mxu0 0
        %1836 = vmatmul.mubr.bf16.gmra.mrb[0].mxu0 %v1537
        %v1837 = vpop.f32.mrb[0].mxu0
        %v1838 = vadd.f32 %v1713, %v1837
        %v1839 = vpop.f32.mrb[0].mxu0
        %v1840 = vpop.f32.mrb[0].mxu0
        %v1841 = vadd.f32 %v1713, %v1840
        %v1842 = vpop.f32.mrb[0].mxu0
        %1843 = vmatprep.mubr.bf16.mxu0 0
        %1844 = vmatmul.mubr.bf16.gmra.mrb[0].mxu0 %v1538
        %v1845 = vpop.f32.mrb[0].mxu0
        %v1846 = vadd.f32 %v1713, %v1845
        %v1847 = vpop.f32.mrb[0].mxu0
        %v1848 = vpop.f32.mrb[0].mxu0
        %v1849 = vadd.f32 %v1713, %v1848
        %v1850 = vpop.f32.mrb[0].mxu0
        %1851 = vmatprep.mubr.bf16.mxu0 0
        %1852 = vmatmul.mubr.bf16.gmra.mrb[0].mxu0 %v1539
        %v1853 = vpop.f32.mrb[0].mxu0
        %v1854 = vadd.f32 %v1713, %v1853
        %v1855 = vpop.f32.mrb[0].mxu0
        %v1856 = vpop.f32.mrb[0].mxu0
        %v1857 = vadd.f32 %v1713, %v1856
        %v1858 = vpop.f32.mrb[0].mxu0
        %1859 = vmatprep.mubr.bf16.mxu0 0
        %1860 = vmatmul.mubr.bf16.gmra.mrb[0].mxu0 %v1540
        %v1861 = vpop.f32.mrb[0].mxu0
        %v1862 = vadd.f32 %v1713, %v1861
        %v1863 = vpop.f32.mrb[0].mxu0
        %v1864 = vpop.f32.mrb[0].mxu0
        %v1865 = vadd.f32 %v1713, %v1864
        %v1866 = vpop.f32.mrb[0].mxu0
        %1867 = vmatprep.mubr.bf16.mxu0 0
        %1868 = vmatmul.mubr.bf16.gmra.mrb[0].mxu0 %v1541
        %v1869 = vpop.f32.mrb[0].mxu0
        %v1870 = vadd.f32 %v1713, %v1869
        %v1871 = vpop.f32.mrb[0].mxu0
        %v1872 = vpop.f32.mrb[0].mxu0
        %v1873 = vadd.f32 %v1713, %v1872
        %v1874 = vpop.f32.mrb[0].mxu0
        %1875 = vmatprep.mubr.bf16.mxu0 0
        %1876 = vmatmul.mubr.bf16.gmra.mrb[0].mxu0 %v1542
        %v1877 = vpop.f32.mrb[0].mxu0
        %v1878 = vadd.f32 %v1713, %v1877
        %v1879 = vpop.f32.mrb[0].mxu0
        %v1880 = vpop.f32.mrb[0].mxu0
        %v1881 = vadd.f32 %v1713, %v1880
        %v1882 = vpop.f32.mrb[0].mxu0
        %1883 = vmatprep.mubr.bf16.mxu0 0
        %1884 = vmatmul.mubr.bf16.gmra.mrb[0].mxu0 %v1543
        %v1885 = vpop.f32.mrb[0].mxu0
        %v1886 = vadd.f32 %v1713, %v1885
        %v1887 = vpop.f32.mrb[0].mxu0
        %v1888 = vpop.f32.mrb[0].mxu0
        %v1889 = vadd.f32 %v1713, %v1888
        %v1890 = vpop.f32.mrb[0].mxu0
        %1891 = vmatprep.mubr.bf16.mxu0 0
        %1892 = vmatmul.mubr.bf16.gmra.mrb[0].mxu0 %v1544
        %v1893 = vpop.f32.mrb[0].mxu0
        %v1894 = vadd.f32 %v1713, %v1893
        %v1895 = vpop.f32.mrb[0].mxu0
        %v1896 = vpop.f32.mrb[0].mxu0
        %v1897 = vadd.f32 %v1713, %v1896
        %v1898 = vpop.f32.mrb[0].mxu0
        %1899 = vmatprep.mubr.bf16.mxu0 0
        %1900 = vmatmul.mubr.bf16.gmra.mrb[0].mxu0 %v1545
        %v1901 = vpop.f32.mrb[0].mxu0
        %v1902 = vadd.f32 %v1713, %v1901
        %v1903 = vpop.f32.mrb[0].mxu0
        %v1904 = vpop.f32.mrb[0].mxu0
        %v1905 = vadd.f32 %v1713, %v1904
        %v1906 = vpop.f32.mrb[0].mxu0
        %1907 = vmatprep.mubr.bf16.mxu0 0
        %1908 = vmatmul.mubr.bf16.gmra.mrb[0].mxu0 %v1546
        %v1909 = vpop.f32.mrb[0].mxu0
        %v1910 = vadd.f32 %v1713, %v1909
        %v1911 = vpop.f32.mrb[0].mxu0
        %v1912 = vpop.f32.mrb[0].mxu0
        %v1913 = vadd.f32 %v1713, %v1912
        %v1914 = vpop.f32.mrb[0].mxu0
        %1915 = vmatprep.mubr.bf16.mxu0 0
        %1916 = vmatmul.mubr.bf16.gmra.mrb[0].mxu0 %v1547
        %v1917 = vpop.f32.mrb[0].mxu0
        %v1918 = vadd.f32 %v1713, %v1917
        %v1919 = vpop.f32.mrb[0].mxu0
        %v1920 = vpop.f32.mrb[0].mxu0
        %v1921 = vadd.f32 %v1713, %v1920
        %v1922 = vpop.f32.mrb[0].mxu0
        %1923 = vdwg.mxu0
        %v1924 = vpack.c.bf16 %v1801, %v1798
        %v1925 = vpack.c.bf16 %v1809, %v1806
        %v1926 = vpack.c.bf16 %v1817, %v1814
        %v1927 = vpack.c.bf16 %v1825, %v1822
        %v1928 = vpack.c.bf16 %v1833, %v1830
        %v1929 = vpack.c.bf16 %v1841, %v1838
        %v1930 = vpack.c.bf16 %v1849, %v1846
        %v1931 = vpack.c.bf16 %v1857, %v1854
        %v1932 = vpack.c.bf16 %v1865, %v1862
        %v1933 = vpack.c.bf16 %v1873, %v1870
        %v1934 = vpack.c.bf16 %v1881, %v1878
        %v1935 = vpack.c.bf16 %v1889, %v1886
        %v1936 = vpack.c.bf16 %v1897, %v1894
        %v1937 = vpack.c.bf16 %v1905, %v1902
        %v1938 = vpack.c.bf16 %v1913, %v1910
        %v1939 = vpack.c.bf16 %v1921, %v1918
        %v1940 = vmul.bf16 %v1924, 1056980736
        %v1941 = vmul.bf16 %v1925, 1056980736
        %v1942 = vmul.bf16 %v1926, 1056980736
        %v1943 = vmul.bf16 %v1927, 1056980736
        %v1944 = vmul.bf16 %v1928, 1056980736
        %v1945 = vmul.bf16 %v1929, 1056980736
        %v1946 = vmul.bf16 %v1930, 1056980736
        %v1947 = vmul.bf16 %v1931, 1056980736
        %v1948 = vmul.bf16 %v1932, 1056980736
        %v1949 = vmul.bf16 %v1933, 1056980736
        %v1950 = vmul.bf16 %v1934, 1056980736
        %v1951 = vmul.bf16 %v1935, 1056980736
        %v1952 = vmul.bf16 %v1936, 1056980736
        %v1953 = vmul.bf16 %v1937, 1056980736
        %v1954 = vmul.bf16 %v1938, 1056980736
        %v1955 = vmul.bf16 %v1939, 1056980736
        %v1956 = vmul.bf16 %v1924, 1027030327
        %v1957 = vmul.bf16 %v1925, 1027030327
        %v1958 = vmul.bf16 %v1926, 1027030327
        %v1959 = vmul.bf16 %v1927, 1027030327
        %v1960 = vmul.bf16 %v1928, 1027030327
        %v1961 = vmul.bf16 %v1929, 1027030327
        %v1962 = vmul.bf16 %v1930, 1027030327
        %v1963 = vmul.bf16 %v1931, 1027030327
        %v1964 = vmul.bf16 %v1932, 1027030327
        %v1965 = vmul.bf16 %v1933, 1027030327
        %v1966 = vmul.bf16 %v1934, 1027030327
        %v1967 = vmul.bf16 %v1935, 1027030327
        %v1968 = vmul.bf16 %v1936, 1027030327
        %v1969 = vmul.bf16 %v1937, 1027030327
        %v1970 = vmul.bf16 %v1938, 1027030327
        %v1971 = vmul.bf16 %v1939, 1027030327
        %v1972 = vmul.bf16 %v1956, %v1924
        %v1973 = vmul.bf16 %v1957, %v1925
        %v1974 = vmul.bf16 %v1958, %v1926
        %v1975 = vmul.bf16 %v1959, %v1927
        %v1976 = vmul.bf16 %v1960, %v1928
        %v1977 = vmul.bf16 %v1961, %v1929
        %v1978 = vmul.bf16 %v1962, %v1930
        %v1979 = vmul.bf16 %v1963, %v1931
        %v1980 = vmul.bf16 %v1964, %v1932
        %v1981 = vmul.bf16 %v1965, %v1933
        %v1982 = vmul.bf16 %v1966, %v1934
        %v1983 = vmul.bf16 %v1967, %v1935
        %v1984 = vmul.bf16 %v1968, %v1936
        %v1985 = vmul.bf16 %v1969, %v1937
        %v1986 = vmul.bf16 %v1970, %v1938
        %v1987 = vmul.bf16 %v1971, %v1939
        %v1988 = vmul.bf16 %v1972, %v1924
        %v1989 = vmul.bf16 %v1973, %v1925
        %v1990 = vmul.bf16 %v1974, %v1926
        %v1991 = vmul.bf16 %v1975, %v1927
        %v1992 = vmul.bf16 %v1976, %v1928
        %v1993 = vmul.bf16 %v1977, %v1929
        %v1994 = vmul.bf16 %v1978, %v1930
        %v1995 = vmul.bf16 %v1979, %v1931
        %v1996 = vmul.bf16 %v1980, %v1932
        %v1997 = vmul.bf16 %v1981, %v1933
        %v1998 = vmul.bf16 %v1982, %v1934
        %v1999 = vmul.bf16 %v1983, %v1935
        %v2000 = vmul.bf16 %v1984, %v1936
        %v2001 = vmul.bf16 %v1985, %v1937
        %v2002 = vmul.bf16 %v1986, %v1938
        %v2003 = vmul.bf16 %v1987, %v1939
        %v2004 = vadd.bf16 %v1924, %v1988
        %v2005 = vadd.bf16 %v1925, %v1989
        %v2006 = vadd.bf16 %v1926, %v1990
        %v2007 = vadd.bf16 %v1927, %v1991
        %v2008 = vadd.bf16 %v1928, %v1992
        %v2009 = vadd.bf16 %v1929, %v1993
        %v2010 = vadd.bf16 %v1930, %v1994
        %v2011 = vadd.bf16 %v1931, %v1995
        %v2012 = vadd.bf16 %v1932, %v1996
        %v2013 = vadd.bf16 %v1933, %v1997
        %v2014 = vadd.bf16 %v1934, %v1998
        %v2015 = vadd.bf16 %v1935, %v1999
        %v2016 = vadd.bf16 %v1936, %v2000
        %v2017 = vadd.bf16 %v1937, %v2001
        %v2018 = vadd.bf16 %v1938, %v2002
        %v2019 = vadd.bf16 %v1939, %v2003
        %v2020 = vmul.bf16 %v2004, 1061961548
        %v2021 = vmul.bf16 %v2005, 1061961548
        %v2022 = vmul.bf16 %v2006, 1061961548
        %v2023 = vmul.bf16 %v2007, 1061961548
        %v2024 = vmul.bf16 %v2008, 1061961548
        %v2025 = vmul.bf16 %v2009, 1061961548
        %v2026 = vmul.bf16 %v2010, 1061961548
        %v2027 = vmul.bf16 %v2011, 1061961548
        %v2028 = vmul.bf16 %v2012, 1061961548
        %v2029 = vmul.bf16 %v2013, 1061961548
        %v2030 = vmul.bf16 %v2014, 1061961548
        %v2031 = vmul.bf16 %v2015, 1061961548
        %v2032 = vmul.bf16 %v2016, 1061961548
        %v2033 = vmul.bf16 %v2017, 1061961548
        %v2034 = vmul.bf16 %v2018, 1061961548
        %v2035 = vmul.bf16 %v2019, 1061961548
        %v2036 = vtanh.bf16.pop %v2020
        %v2037 = vtanh.bf16.pop %v2021
        %v2038 = vtanh.bf16.pop %v2022
        %v2039 = vtanh.bf16.pop %v2023
        %v2040 = vtanh.bf16.pop %v2024
        %v2041 = vtanh.bf16.pop %v2025
        %v2042 = vtanh.bf16.pop %v2026
        %v2043 = vtanh.bf16.pop %v2027
        %v2044 = vtanh.bf16.pop %v2028
        %v2045 = vtanh.bf16.pop %v2029
        %v2046 = vtanh.bf16.pop %v2030
        %v2047 = vtanh.bf16.pop %v2031
        %v2048 = vtanh.bf16.pop %v2032
        %v2049 = vtanh.bf16.pop %v2033
        %v2050 = vtanh.bf16.pop %v2034
        %v2051 = vtanh.bf16.pop %v2035
        %v2052 = vadd.bf16 %v2036, 1065369472
        %v2053 = vadd.bf16 %v2037, 1065369472
        %v2054 = vadd.bf16 %v2038, 1065369472
        %v2055 = vadd.bf16 %v2039, 1065369472
        %v2056 = vadd.bf16 %v2040, 1065369472
        %v2057 = vadd.bf16 %v2041, 1065369472
        %v2058 = vadd.bf16 %v2042, 1065369472
        %v2059 = vadd.bf16 %v2043, 1065369472
        %v2060 = vadd.bf16 %v2044, 1065369472
        %v2061 = vadd.bf16 %v2045, 1065369472
        %v2062 = vadd.bf16 %v2046, 1065369472
        %v2063 = vadd.bf16 %v2047, 1065369472
        %v2064 = vadd.bf16 %v2048, 1065369472
        %v2065 = vadd.bf16 %v2049, 1065369472
        %v2066 = vadd.bf16 %v2050, 1065369472
        %v2067 = vadd.bf16 %v2051, 1065369472
        %v2068 = vmul.bf16 %v1940, %v2052
        %v2069 = vmul.bf16 %v1941, %v2053
        %v2070 = vmul.bf16 %v1942, %v2054
        %v2071 = vmul.bf16 %v1943, %v2055
        %v2072 = vmul.bf16 %v1944, %v2056
        %v2073 = vmul.bf16 %v1945, %v2057
        %v2074 = vmul.bf16 %v1946, %v2058
        %v2075 = vmul.bf16 %v1947, %v2059
        %v2076 = vmul.bf16 %v1948, %v2060
        %v2077 = vmul.bf16 %v1949, %v2061
        %v2078 = vmul.bf16 %v1950, %v2062
        %v2079 = vmul.bf16 %v1951, %v2063
        %v2080 = vmul.bf16 %v1952, %v2064
        %v2081 = vmul.bf16 %v1953, %v2065
        %v2082 = vmul.bf16 %v1954, %v2066
        %v2083 = vmul.bf16 %v1955, %v2067
        %v2084 = vld [vmem:[%s8] sm:$0xf]
        %2085 = vmatprep.subr.bf16.mxu0 0
        %2086 = vmatpush1.bf16.xpose.msra.mxu0 %v2068
        %2087 = vmatprep.subr.bf16.mxu0 0
        %2088 = vmatpush1.bf16.xpose.msra.mxu0 %v2069
        %2089 = vmatprep.subr.bf16.mxu0 0
        %2090 = vmatpush1.bf16.xpose.msra.mxu0 %v2070
        %2091 = vmatprep.subr.bf16.mxu0 0
        %2092 = vmatpush1.bf16.xpose.msra.mxu0 %v2071
        %2093 = vmatprep.subr.bf16.mxu0 0
        %2094 = vmatpush1.bf16.xpose.msra.mxu0 %v2072
        %2095 = vmatprep.subr.bf16.mxu0 0
        %2096 = vmatpush1.bf16.xpose.msra.mxu0 %v2073
        %2097 = vmatprep.subr.bf16.mxu0 0
        %2098 = vmatpush1.bf16.xpose.msra.mxu0 %v2074
        %2099 = vmatprep.subr.bf16.mxu0 0
        %2100 = vmatpush1.bf16.xpose.msra.mxu0 %v2075
        %2101 = vmatprep.subr.bf16.mxu0 0
        %2102 = vmatpush1.bf16.xpose.msra.mxu0 %v2076
        %2103 = vmatprep.subr.bf16.mxu0 0
        %2104 = vmatpush1.bf16.xpose.msra.mxu0 %v2077
        %2105 = vmatprep.subr.bf16.mxu0 0
        %2106 = vmatpush1.bf16.xpose.msra.mxu0 %v2078
        %2107 = vmatprep.subr.bf16.mxu0 0
        %2108 = vmatpush1.bf16.xpose.msra.mxu0 %v2079
        %2109 = vmatprep.subr.bf16.mxu0 0
        %2110 = vmatpush1.bf16.xpose.msra.mxu0 %v2080
        %2111 = vmatprep.subr.bf16.mxu0 0
        %2112 = vmatpush1.bf16.xpose.msra.mxu0 %v2081
        %2113 = vmatprep.subr.bf16.mxu0 0
        %2114 = vmatpush1.bf16.xpose.msra.mxu0 %v2082
        %2115 = vmatprep.subr.bf16.mxu0 0
        %2116 = vmatpush1.bf16.xpose.msra.mxu0 %v2083
        %2117 = vmatprep.mubr.bf16.mxu0 0
        %2118 = vmatmul.mubr.bf16.gmra.mrb[0].mxu0 %v2084
        %v2119 = vpop.f32.mrb[0].mxu0
        %v2120 = vadd.f32 0.0, %v2119
        %v2121 = vpop.f32.mrb[0].mxu0
        %v2122 = vadd.f32 0.0, %v2121
        %v2123 = vpop.f32.mrb[0].mxu0
        %v2124 = vpop.f32.mrb[0].mxu0
        %2125 = vdwg.mxu0
        %v2126 = vrot.slane %v2120, 4
        %v2127 = vadd.f32 %v2120, %v2126
        %v2128 = vrot.slane %v2127, 2
        %v2129 = vadd.f32 %v2127, %v2128
        %v2130 = vrot.slane %v2129, 1
        %v2131 = vadd.f32 %v2129, %v2130
        %v2132 = vrot.slane %v2122, 4
        %v2133 = vadd.f32 %v2122, %v2132
        %v2134 = vrot.slane %v2133, 2
        %v2135 = vadd.f32 %v2133, %v2134
        %v2136 = vrot.slane %v2135, 1
        %v2137 = vadd.f32 %v2135, %v2136
        %v2138 = vld [vmem:[#allocation2] sm:$0x1]
        %2140 = vset.pattern.permute.xlu0 0
        %2141 = vperm.xlu0 %2140, %v2138
        %v2142 = vpop.permute.xlu0 %2141
        %v2144 = vlaneseq
        %v2145 = vshrl.u32 %v2144, 7
        %v2146 = vsub.s32 0, %v2145
        %v2147 = vrot.slane %v2142, %v2146
        %v2148 = vadd.f32 %v2131, %v2147
        %v2149 = vadd.f32 %v2137, %v2147
        %v2150 = vld [vmem:[%s555] sm:$0x3]
        %v2151 = vlaneseq
        %v2152 = vshrl.u32 %v2151, 7
        %v2153 = vlaneseq
        %v2154 = vshrl.u32 %v2153, 7
        %v2155 = vsub.s32 0, %v2154
        %v2156 = vrot.slane %v2150, %v2155
        %v2157 = vlaneseq
        %v2158 = vshrl.u32 %v2157, 7
        %v2159 = vsub.s32 1, %v2158
        %v2160 = vrot.slane %v2150, %v2159
        %vm2161 = vcmp.eq.s32.totalorder %v2152, %v2156
        %vm2162 = vcmp.eq.s32.totalorder %v2152, %v2160
        %v2163 = vsel %vm2161, 1, 0
        %v2164 = vsel %vm2162, 1, 0
        %v2165 = vcvt.s32.f32 %v2163
        %v2166 = vcvt.s32.f32 %v2164
        %v2167 = vld [vmem:[%s563] sm:$0xff]
        %v2168 = vsel %vm2161, %v2148, -1e+30
        %v2169 = vsel %vm2162, %v2149, -1e+30
        %v2170 = vmax.f32 %v2168, %v2169
        %2171 = vmax.xlane.f32.xlu0 %v2170
        %v2172 = vpop.xlane.xlu0 %2171
        %v2173 = vmax.f32 %v2167, %v2172
        %v2174 = vsub.f32 %v2167, %v2173
        %v2175 = vmul.f32 %v2174, 1.442695
        %v2176 = vpow.pop %v2175
        %2178 = vset.pattern.permute.xlu0 0
        %2179 = vperm.xlu0 %2178, %v2173
        %v2180 = vpop.permute.xlu0 %2179
        %v2182 = vmul.f32 %v2165, %v2180
        %v2183 = vmul.f32 %v2166, %v2180
        %v2184 = vrot.slane %v2182, 4
        %v2185 = vadd.f32 %v2182, %v2184
        %v2186 = vrot.slane %v2185, 2
        %v2187 = vadd.f32 %v2185, %v2186
        %v2188 = vrot.slane %v2187, 1
        %v2189 = vadd.f32 %v2187, %v2188
        %v2190 = vrot.slane %v2183, 4
        %v2191 = vadd.f32 %v2183, %v2190
        %v2192 = vrot.slane %v2191, 2
        %v2193 = vadd.f32 %v2191, %v2192
        %v2194 = vrot.slane %v2193, 1
        %v2195 = vadd.f32 %v2193, %v2194
        %v2196 = vsub.f32 %v2148, %v2189
        %v2197 = vsub.f32 %v2149, %v2195
        %v2198 = vmul.f32 %v2196, 1.442695
        %v2199 = vpow.pop %v2198
        %v2200 = vmul.f32 %v2197, 1.442695
        %v2201 = vpow.pop %v2200
        %v2202 = vmul.f32 %v2165, %v2199
        %v2203 = vmul.f32 %v2166, %v2201
        %v2204 = vld [vmem:[%s567] sm:$0xff]
        %v2205 = vmul.f32 %v2204, %v2176
        %v2206 = vadd.f32 %v2202, %v2203
        %2207 = vadd.xlane.f32.xlu0 %v2206
        %v2208 = vpop.xlane.xlu0 %2207
        %v2209 = vadd.f32 %v2205, %v2208
        %vm2210 = vcmask 7168
        %2211 = vst.msk [vmem:[%s567] sm:$0xff] %vm2210, %v2209
        %v2212 = vld [vmem:[%s536] sm:$0xff]
        %2214 = vset.pattern.permute.xlu0 0
        %2215 = vperm.xlu0 %2214, %v2176
        %v2216 = vpop.permute.xlu0 %2215
        %v2218 = vmul.f32 %v2212, %v2216
        %v2219 = vunpack.c.l.bf16 %v1532
        %v2220 = vunpack.c.h.bf16 %v1532
        %v2221 = vunpack.c.l.bf16 %v1533
        %v2222 = vunpack.c.h.bf16 %v1533
        %v2223 = vunpack.c.l.bf16 %v1534
        %v2224 = vunpack.c.h.bf16 %v1534
        %v2225 = vunpack.c.l.bf16 %v1535
        %v2226 = vunpack.c.h.bf16 %v1535
        %v2227 = vunpack.c.l.bf16 %v1536
        %v2228 = vunpack.c.h.bf16 %v1536
        %v2229 = vunpack.c.l.bf16 %v1537
        %v2230 = vunpack.c.h.bf16 %v1537
        %v2231 = vunpack.c.l.bf16 %v1538
        %v2232 = vunpack.c.h.bf16 %v1538
        %v2233 = vunpack.c.l.bf16 %v1539
        %v2234 = vunpack.c.h.bf16 %v1539
        %v2235 = vunpack.c.l.bf16 %v1540
        %v2236 = vunpack.c.h.bf16 %v1540
        %v2237 = vunpack.c.l.bf16 %v1541
        %v2238 = vunpack.c.h.bf16 %v1541
        %v2239 = vunpack.c.l.bf16 %v1542
        %v2240 = vunpack.c.h.bf16 %v1542
        %v2241 = vunpack.c.l.bf16 %v1543
        %v2242 = vunpack.c.h.bf16 %v1543
        %v2243 = vunpack.c.l.bf16 %v1544
        %v2244 = vunpack.c.h.bf16 %v1544
        %v2245 = vunpack.c.l.bf16 %v1545
        %v2246 = vunpack.c.h.bf16 %v1545
        %v2247 = vunpack.c.l.bf16 %v1546
        %v2248 = vunpack.c.h.bf16 %v1546
        %v2249 = vunpack.c.l.bf16 %v1547
        %v2250 = vunpack.c.h.bf16 %v1547
        %2251 = vmatprep.subr.mxu0 0.0
        %2252 = vmatpush1.msra.mxu0 %v2219
        %2253 = vmatprep.subr.mxu0 0.0
        %2254 = vmatpush1.msra.mxu0 %v2220
        %2255 = vmatprep.subr.mxu0 0.0
        %2256 = vmatpush1.msra.mxu0 %v2221
        %2257 = vmatprep.subr.mxu0 0.0
        %2258 = vmatpush1.msra.mxu0 %v2222
        %2259 = vmatprep.subr.mxu0 0.0
        %2260 = vmatpush1.msra.mxu0 %v2223
        %2261 = vmatprep.subr.mxu0 0.0
        %2262 = vmatpush1.msra.mxu0 %v2224
        %2263 = vmatprep.subr.mxu0 0.0
        %2264 = vmatpush1.msra.mxu0 %v2225
        %2265 = vmatprep.subr.mxu0 0.0
        %2266 = vmatpush1.msra.mxu0 %v2226
        %2267 = vmatprep.subr.mxu0 0.0
        %2268 = vmatpush1.msra.mxu0 %v2227
        %2269 = vmatprep.subr.mxu0 0.0
        %2270 = vmatpush1.msra.mxu0 %v2228
        %2271 = vmatprep.subr.mxu0 0.0
        %2272 = vmatpush1.msra.mxu0 %v2229
        %2273 = vmatprep.subr.mxu0 0.0
        %2274 = vmatpush1.msra.mxu0 %v2230
        %2275 = vmatprep.subr.mxu0 0.0
        %2276 = vmatpush1.msra.mxu0 %v2231
        %2277 = vmatprep.subr.mxu0 0.0
        %2278 = vmatpush1.msra.mxu0 %v2232
        %2279 = vmatprep.subr.mxu0 0.0
        %2280 = vmatpush1.msra.mxu0 %v2233
        %2281 = vmatprep.subr.mxu0 0.0
        %2282 = vmatpush1.msra.mxu0 %v2234
        %2283 = vmatprep.subr.mxu0 0.0
        %2284 = vmatpush1.msra.mxu0 %v2235
        %2285 = vmatprep.subr.mxu0 0.0
        %2286 = vmatpush1.msra.mxu0 %v2236
        %2287 = vmatprep.subr.mxu0 0.0
        %2288 = vmatpush1.msra.mxu0 %v2237
        %2289 = vmatprep.subr.mxu0 0.0
        %2290 = vmatpush1.msra.mxu0 %v2238
        %2291 = vmatprep.subr.mxu0 0.0
        %2292 = vmatpush1.msra.mxu0 %v2239
        %2293 = vmatprep.subr.mxu0 0.0
        %2294 = vmatpush1.msra.mxu0 %v2240
        %2295 = vmatprep.subr.mxu0 0.0
        %2296 = vmatpush1.msra.mxu0 %v2241
        %2297 = vmatprep.subr.mxu0 0.0
        %2298 = vmatpush1.msra.mxu0 %v2242
        %2299 = vmatprep.subr.mxu0 0.0
        %2300 = vmatpush1.msra.mxu0 %v2243
        %2301 = vmatprep.subr.mxu0 0.0
        %2302 = vmatpush1.msra.mxu0 %v2244
        %2303 = vmatprep.subr.mxu0 0.0
        %2304 = vmatpush1.msra.mxu0 %v2245
        %2305 = vmatprep.subr.mxu0 0.0
        %2306 = vmatpush1.msra.mxu0 %v2246
        %2307 = vmatprep.subr.mxu0 0.0
        %2308 = vmatpush1.msra.mxu0 %v2247
        %2309 = vmatprep.subr.mxu0 0.0
        %2310 = vmatpush1.msra.mxu0 %v2248
        %2311 = vmatprep.subr.mxu0 0.0
        %2312 = vmatpush1.msra.mxu0 %v2249
        %2313 = vmatprep.subr.mxu0 0.0
        %2314 = vmatpush1.msra.mxu0 %v2250
        %2315 = vmatprep.mubr.f32.mxu0 %v2203
        %2316 = vmatmul.mubr.f32.gmra.mrb[0].mxu0 %v2202
        %v2317 = vpop.f32.mrb[0].mxu0
        %v2318 = vadd.f32 0.0, %v2317
        %v2319 = vpop.f32.mrb[0].mxu0
        %2320 = vdwg.mxu0
        %v2321 = vadd.f32 %v2218, %v2318
        %2322 = vst [vmem:[%s536] sm:$0xff] %v2321
        %2323 = vst.msk [vmem:[%s563] sm:$0xff] %vm2210, %v2173
        %s2324 = sand.u32 %s283, 1
        %s2325 = scalar_lea.sflag [#allocation5], %s2324
        %s2326 = sand.u32 %s283, 1
        %s2327 = smul.addr %s2326, 128
        %s2328 = scalar_lea.vmem [#allocation9], %s2327
        %s2329 = sand.u32 %s309, 1
        %s2330 = scalar_lea.sflag [#allocation11], %s2329
        %s2331 = sand.u32 %s309, 1
        %s2332 = smul.addr %s2331, 8
        %s2333 = scalar_lea.vmem [#allocation10], %s2332
        %p2334 = scmp.lt.s32.totalorder %s41, 1
        %s2335 = scalar_select %p2334, %s41, 1
        %s2336 = smul.addr %s2335, 8
        %s2337 = scalar_lea.vmem %s12, %s2336
        %p2338 = scmp.lt.s32.totalorder %s41, 1
        %s2339 = scalar_select %p2338, %s41, 1
        %s2340 = smul.addr %s2339, 8
        %s2341 = scalar_lea.vmem %s13, %s2340
        // Predicated region
        $region77: #{tpu_custom_call.1} parent=59 // pred_check
          %p2342 = pneg %p293
        $region78: #{tpu_custom_call.1} parent=59 // pred_check_branch
          %2344 = sbr.rel (%p2342) target = $region80
        $region79: #{tpu_custom_call.1} parent=59 // pred_region
          %s2345 = sadd.s32 %s41, %s42
          %s2346 = smul.u32 32, %s2345
          %s2348 = ssub.s32 2048, 2048
          %2349 = vsyncadd %s2325, %s2348
          %s2350 = smul.addr %s2346, 64
          %s2351 = scalar_lea.hbm %s10, %s2350
          %s2352 = sshll.u32 %s2328, 4
          %s2353 = int_to_ptr.vmem [resolvable:$true] %s2352
          %2358 = dma.vmem_to_hbm [thread:$0]  %s2353, 2048, %s2351, %s2325, 64, 64, 4
        $region80: #{tpu_custom_call.1} parent=59 // pred_fallthru
          _
        // Predicated region
        $region81: #{tpu_custom_call.1} parent=59 // pred_check
          %p2359 = pneg %p319
        $region82: #{tpu_custom_call.1} parent=59 // pred_check_branch
          %2361 = sbr.rel (%p2359) target = $region84
        $region83: #{tpu_custom_call.1} parent=59 // pred_region
          %s2363 = ssub.s32 128, 128
          %2364 = vsyncadd %s2330, %s2363
          %s2365 = smul.addr %s41, 128
          %s2366 = scalar_lea.hbm %s11, %s2365
          %s2368 = sshll.u32 %s2333, 4
          %s2369 = int_to_ptr.vmem [resolvable:$true] %s2368
          %2371 = dma.vmem_to_hbm [thread:$0]  %s2369, 128, %s2366, %s2330
        $region84: #{tpu_custom_call.1} parent=59 // pred_fallthru
          _
        // Predicated region
        $region85: #{tpu_custom_call.1} parent=59 // pred_check
          %p2372 = pneg %p345
        $region86: #{tpu_custom_call.1} parent=59 // pred_check_branch
          %2374 = sbr.rel (%p2372) target = $region88
        $region87: #{tpu_custom_call.1} parent=59 // pred_region
          _
        $region88: #{tpu_custom_call.1} parent=59 // pred_fallthru
          _
        // Predicated region
        $region89: #{tpu_custom_call.1} parent=59 // pred_check
          %p2375 = pneg %p371
        $region90: #{tpu_custom_call.1} parent=59 // pred_check_branch
          %2377 = sbr.rel (%p2375) target = $region92
        $region91: #{tpu_custom_call.1} parent=59 // pred_region
          _
        $region92: #{tpu_custom_call.1} parent=59 // pred_fallthru
          _
      $region60: #{tpu_custom_call.1} parent=5 // pred_fallthru
        _
      %p2378 = scmp.le.s32.totalorder 2, %s32
      // Predicated region
      $region93: #{tpu_custom_call.1} parent=5 // pred_check
        %p2379 = pneg %p2378
      $region94: #{tpu_custom_call.1} parent=5 // pred_check_branch
        %2381 = sbr.rel (%p2379) target = $region96
      $region95: #{tpu_custom_call.1} parent=5 // pred_region
        %s2382 = ssub.s32 %s32, 2
        // Predicated region
        $region97: #{tpu_custom_call.1} parent=95 // pred_check
          %p2383 = pneg %p299
        $region98: #{tpu_custom_call.1} parent=95 // pred_check_branch
          %2385 = sbr.rel (%p2383) target = $region100
        $region99: #{tpu_custom_call.1} parent=95 // pred_region
          %s2386 = sand.u32 %s284, 1
          %s2387 = scalar_lea.sflag [#allocation5], %s2386
          %s2388 = sand.u32 %s284, 1
          %s2389 = smul.addr %s2388, 128
          %s2390 = scalar_lea.vmem [#allocation9], %s2389
          %2391 = dma.done %s2387, 2048
        $region100: #{tpu_custom_call.1} parent=95 // pred_fallthru
          _
        // Predicated region
        $region101: #{tpu_custom_call.1} parent=95 // pred_check
          %p2392 = pneg %p325
        $region102: #{tpu_custom_call.1} parent=95 // pred_check_branch
          %2394 = sbr.rel (%p2392) target = $region104
        $region103: #{tpu_custom_call.1} parent=95 // pred_region
          %s2395 = sand.u32 %s310, 1
          %s2396 = scalar_lea.sflag [#allocation11], %s2395
          %s2397 = sand.u32 %s310, 1
          %s2398 = smul.addr %s2397, 8
          %s2399 = scalar_lea.vmem [#allocation10], %s2398
          %2400 = dma.done %s2396, 128
        $region104: #{tpu_custom_call.1} parent=95 // pred_fallthru
          _
        // Predicated region
        $region105: #{tpu_custom_call.1} parent=95 // pred_check
          %p2401 = pneg %p351
        $region106: #{tpu_custom_call.1} parent=95 // pred_check_branch
          %2403 = sbr.rel (%p2401) target = $region108
        $region107: #{tpu_custom_call.1} parent=95 // pred_region
          %p2404 = scmp.lt.s32.totalorder %s43, 1
          %s2405 = scalar_select %p2404, %s43, 1
          %s2406 = smul.addr %s2405, 8
          %s2407 = scalar_lea.vmem %s12, %s2406
        $region108: #{tpu_custom_call.1} parent=95 // pred_fallthru
          _
        // Predicated region
        $region109: #{tpu_custom_call.1} parent=95 // pred_check
          %p2408 = pneg %p377
        $region110: #{tpu_custom_call.1} parent=95 // pred_check_branch
          %2410 = sbr.rel (%p2408) target = $region112
        $region111: #{tpu_custom_call.1} parent=95 // pred_region
          %p2411 = scmp.lt.s32.totalorder %s43, 1
          %s2412 = scalar_select %p2411, %s43, 1
          %s2413 = smul.addr %s2412, 8
          %s2414 = scalar_lea.vmem %s13, %s2413
        $region112: #{tpu_custom_call.1} parent=95 // pred_fallthru
          _
      $region96: #{tpu_custom_call.1} parent=5 // pred_fallthru
        _
    $region6: #{tpu_custom_call.1} parent=1 // loop_footer
      %s36 = sadd.s32 1, %s32
    $region7: #{tpu_custom_call.1} parent=1 // loop_footer_branch
      %31 = sbr.rel target = $region3
    $region8: #{tpu_custom_call.1} parent=1 // loop_exit
      _
    %2415 = vsyncpa [#allocation4], 1
    %s2416 = scalar_lea.sflag [#allocation4], 1
    %2417 = vsyncpa %s2416, 1
    %2418 = vsyncpa [#allocation7], 1
    %2419 = vsyncpa [#allocation5], 1
    %s2420 = scalar_lea.sflag [#allocation5], 1
    %2421 = vsyncpa %s2420, 1
    %2422 = vsyncpa [#allocation11], 1
    %s2423 = scalar_lea.sflag [#allocation11], 1
    %2424 = vsyncpa %s2423, 1

</llo_original>
